<compile_context>
chip_gen: v7x
topology: tpu7x:2x2x1
jax: 0.10.0
libtpu: 0.0.40
codegen_flags: <defaults>
</compile_context>

<pallas_src>
import functools
import math

import jax
import jax.numpy as jnp
import numpy as np
from jax import lax
from jax.experimental import pallas as pl
from jax.experimental.pallas import tpu as pltpu

NUM_GROUPS = 32           # normalization(channels) == GroupNorm32(32, channels)
EPS = 1e-5
NEG_INF = -1e30           # finite "minus infinity": exp(m_i - m_new) never sees inf-inf


def _attention_block_kernel(x_ref, gmat_ref, gamma_ref, beta_ref,
                            wqkv_ref, bqkv_ref, wproj_ref, bproj_ref,
                            o_ref, qkv_scr, hout_scr, *,
                            num_heads, t_real, kv_tile, exp_dtype):
    f32 = jnp.float32
    bf16 = jnp.bfloat16
    x = x_ref[...].astype(f32)                        # [C, Tp] (batch dim squeezed)
    C, Tp = x.shape
    ch = C // num_heads
    n_kv = Tp // kv_tile
    mask_pad = t_real < Tp                            # static python bool

    # ---- GroupNorm(32, C), f32.  Group stats via one same-group-mask matmul
    # over [row_sum | row_sumsq]; padded columns are zero so only the real
    # element count (t_real) enters the statistics.  (Cost is negligible next
    # to the attention matmuls; kept in f32 for accuracy.) ----
    cnt = (C // NUM_GROUPS) * t_real
    row_stats = jnp.concatenate(
        [jnp.sum(x, axis=1, keepdims=True),
         jnp.sum(x * x, axis=1, keepdims=True)], axis=1)             # [C, 2]
    g_stats = jnp.dot(gmat_ref[...], row_stats,
                      preferred_element_type=f32) * (1.0 / cnt)      # [C, 2]
    mean_c = g_stats[:, 0:1]
    var_c = jnp.maximum(g_stats[:, 1:2] - mean_c * mean_c, 0.0)
    a_aff = gamma_ref[...] * lax.rsqrt(var_c + EPS)                  # [C, 1]
    b_aff = beta_ref[...] - mean_c * a_aff
    xn = (x * a_aff + b_aff).astype(bf16)                            # bf16 MXU operand

    # ---- qkv 1x1 conv == channel matmul; ONE bf16 cast into the scratch slab.
    qkv_scr[...] = (jnp.dot(wqkv_ref[...], xn, preferred_element_type=f32)
                    + bqkv_ref[...]).astype(bf16)                    # [3C, Tp]

    # ---- per-head flash attention, lane-dense [*, Tp] running state. ----
    for h in range(num_heads):                        # small static loop
        base = 3 * ch * h                             # legacy layout: per-head [q|k|v]
        qh = qkv_scr[base:base + ch, :]               # [ch, Tp] bf16 (loaded once)

        def kv_step(lo, m_i, l_i, acc):
            k_t = qkv_scr[base + ch:base + 2 * ch, pl.ds(lo, kv_tile)]      # [ch, kv]
            v_t = qkv_scr[base + 2 * ch:base + 3 * ch, pl.ds(lo, kv_tile)]  # [ch, kv]
            # s[s', t] = sum_c k[c, s'] q[c, t]  -> keys on sublanes, queries on lanes
            s = lax.dot_general(k_t, qh, (((0,), (0,)), ((), ())),
                                preferred_element_type=f32)          # [kv, Tp]
            if mask_pad:                                             # static check
                key_idx = lax.broadcasted_iota(jnp.int32, (kv_tile, 1), 0) + lo
                s = s + jnp.where(key_idx < t_real, 0.0, NEG_INF)    # [kv, 1] bias
            m_new = jnp.maximum(m_i, jnp.max(s, axis=0, keepdims=True))     # [1, Tp]
            alpha = jnp.exp(m_i - m_new)                             # [1, Tp] f32
            p = jnp.exp((s - m_new).astype(exp_dtype))               # [kv, Tp]
            l_new = alpha * l_i + jnp.sum(p.astype(f32), axis=0, keepdims=True)
            # acc[c, t] += sum_s v[c, s] * p[s, t]   (plain matmul, lane-dense out)
            acc_new = alpha * acc + jnp.dot(v_t, p.astype(bf16),
                                            preferred_element_type=f32)     # [ch, Tp]
            return m_new, l_new, acc_new

        m_i = jnp.full((1, Tp), NEG_INF, f32)
        l_i = jnp.zeros((1, Tp), f32)
        acc = jnp.zeros((ch, Tp), f32)
        if n_kv <= 4:
            # Short trip count: static offsets / full unroll (LLO visibility).
            for kvi in range(n_kv):
                m_i, l_i, acc = kv_step(kvi * kv_tile, m_i, l_i, acc)
        else:
            # Long sequences: carried loop bounds the live set per iteration.
            def body(kvi, carry):
                lo = pl.multiple_of(kvi * kv_tile, kv_tile)
                return kv_step(lo, *carry)
            m_i, l_i, acc = lax.fori_loop(0, n_kv, body, (m_i, l_i, acc))

        out_h = acc * pl.reciprocal(l_i, approx=True)                # [ch, Tp] f32
        hout_scr[h * ch:(h + 1) * ch, :] = out_h.astype(bf16)

    # ---- single fused output projection (contraction depth = C) + residual.
    proj = jnp.dot(wproj_ref[...], hout_scr[...],
                   preferred_element_type=f32)                       # [C, Tp]
    o_ref[...] = (x_ref[...].astype(f32) + proj + bproj_ref[...]).astype(o_ref.dtype)


def attention_block(x_nchw, params, num_heads):
    B, C, H, W = x_nchw.shape
    T = H * W
    Tp = ((T + 127) // 128) * 128            # lane-dense last dim (multiple of 128)
    gmat, gamma, beta, wqkv, bqkv, wproj, bproj = params
    ch = C // num_heads

    # Fold the softmax scale into the q rows of the qkv conv weight/bias.
    scale2 = 1.0 / math.sqrt(ch)             # (1/ch**0.25)**2
    is_q_row = (np.arange(3 * C) % (3 * ch)) < ch
    row_scale = jnp.asarray(np.where(is_q_row, scale2, 1.0), jnp.float32)[:, None]
    wqkv_b = (wqkv * row_scale).astype(jnp.bfloat16)
    bqkv_s = (bqkv * row_scale).astype(jnp.float32)
    wproj_b = wproj.astype(jnp.bfloat16)

    x = x_nchw.reshape(B, C, T)
    if Tp != T:
        x = jnp.pad(x, ((0, 0), (0, 0), (0, Tp - T)))

    # --- generation-aware knobs (VMEM capacity, exp dtype) ---
    try:
        vmem_cap = int(pltpu.get_tpu_info().vmem_capacity_bytes)
    except Exception:
        vmem_cap = 64 * 2 ** 20              # conservative fallback
    try:
        kind = jax.devices()[0].device_kind.lower()
    except Exception:
        kind = ""
    # bf16 exp only where the EUP supports it (v6e / v7x); f32 on v5e & older.
    exp_dtype = (jnp.bfloat16 if any(t in kind for t in ("v6", "v7", "7x"))
                 else jnp.float32)

    def footprint(kv):
        io = 2 * 2 * C * Tp * 4                       # x + out blocks, double-buffered
        wts = 2 * (C * C * 4 + 3 * C * C * 2 + C * C * 2 + 16 * C * 4)
        scr = 3 * C * Tp * 2 + C * Tp * 2             # qkv + hout bf16 scratch
        act = (3 * C * Tp * 4                         # f32 qkv value before the cast
               + C * Tp * 2 + C * Tp * 4              # xn bf16, proj f32
               + ch * Tp * 4                          # per-head accumulator
               + kv * Tp * (4 + 4 + 2))               # s, p, p(bf16)
        return io + wts + scr + act

    # Largest kv tile (256/512 feed the 256-wide MXU natively, 128 minimum)
    # whose footprint leaves headroom in this generation's VMEM.
    kv_tile = 128
    for kv in (512, 256, 128):
        if Tp % kv == 0 and footprint(kv) <= int(0.45 * vmem_cap):
            kv_tile = kv
            break
    est = footprint(kv_tile)
    vmem_limit = int(max(min(int(1.5 * est), int(0.92 * vmem_cap)), 32 * 2 ** 20))
    vmem_limit = min(vmem_limit, vmem_cap)

    kernel = functools.partial(_attention_block_kernel, num_heads=num_heads,
                               t_real=T, kv_tile=kv_tile, exp_dtype=exp_dtype)
    out = pl.pallas_call(
        kernel,
        out_shape=jax.ShapeDtypeStruct((B, C, Tp), x.dtype),
        grid_spec=pltpu.PrefetchScalarGridSpec(
            num_scalar_prefetch=0,
            grid=(B,),
            in_specs=[
                pl.BlockSpec((None, C, Tp), lambda b: (b, 0, 0)),   # x (batch squeezed)
                pl.BlockSpec((C, C), lambda b: (0, 0)),             # same-group mask
                pl.BlockSpec((C, 1), lambda b: (0, 0)),             # gamma
                pl.BlockSpec((C, 1), lambda b: (0, 0)),             # beta
                pl.BlockSpec((3 * C, C), lambda b: (0, 0)),         # Wqkv (bf16, scaled)
                pl.BlockSpec((3 * C, 1), lambda b: (0, 0)),         # bqkv (scaled)
                pl.BlockSpec((C, C), lambda b: (0, 0)),             # Wproj (bf16)
                pl.BlockSpec((C, 1), lambda b: (0, 0)),             # bproj
            ],
            out_specs=pl.BlockSpec((None, C, Tp), lambda b: (b, 0, 0)),
            scratch_shapes=[
                pltpu.VMEM((3 * C, Tp), jnp.bfloat16),   # qkv slab (single bf16 cast)
                pltpu.VMEM((C, Tp), jnp.bfloat16),       # concatenated head outputs
            ],
        ),
        compiler_params=pltpu.CompilerParams(
            dimension_semantics=("parallel",),
            vmem_limit_bytes=vmem_limit),
    )(x, gmat, gamma, beta, wqkv_b, bqkv_s, wproj_b, bproj)
    return out[:, :, :T].reshape(B, C, H, W)


def reference(x_nchw, params, num_heads):
    """Pure-JAX f32 re-statement of AttentionBlock._forward for validation."""
    B, C, H, W = x_nchw.shape
    T = H * W
    _, gamma, beta, wqkv, bqkv, wproj, bproj = params
    x = x_nchw.reshape(B, C, T).astype(jnp.float32)
    G = NUM_GROUPS
    xg = x.reshape(B, G, (C // G) * T)
    mean = xg.mean(axis=2, keepdims=True)
    var = ((xg - mean) ** 2).mean(axis=2, keepdims=True)
    xn = ((xg - mean) / jnp.sqrt(var + EPS)).reshape(B, C, T)
    xn = xn * gamma[None] + beta[None]
    qkv = jnp.einsum('oc,bct->bot', wqkv, xn) + bqkv[None]          # [B, 3C, T]
    qkv = qkv.reshape(B * num_heads, -1, T)
    ch = C // num_heads
    q, k, v = qkv[:, :ch], qkv[:, ch:2 * ch], qkv[:, 2 * ch:]
    scale = 1.0 / math.sqrt(math.sqrt(ch))
    w = jnp.einsum('bct,bcs->bts', q * scale, k * scale)
    w = jax.nn.softmax(w, axis=-1)
    hout = jnp.einsum('bts,bcs->bct', w, v).reshape(B, C, T)
    proj = jnp.einsum('oc,bct->bot', wproj, hout) + bproj[None]
    return (x + proj).reshape(B, C, H, W)


if __name__ == "__main__":
    # channels must be divisible by NUM_GROUPS (GroupNorm32) and by num_heads.
    B, C, H, W = 2, 64, 8, 8
    num_heads = 2

    key = jax.random.PRNGKey(0)
    k_x, k_g, k_b, k_wq, k_bq, k_wp, k_bp = jax.random.split(key, 7)
    x = jax.random.normal(k_x, (B, C, H, W), dtype=jnp.float32)

    # Same-group indicator matrix for the in-kernel GroupNorm statistics.
    grp = np.arange(C) // (C // NUM_GROUPS)
    gmat = jnp.asarray((grp[:, None] == grp[None, :]).astype(np.float32))

    gamma = 1.0 + 0.1 * jax.random.normal(k_g, (C, 1), jnp.float32)
    beta = 0.1 * jax.random.normal(k_b, (C, 1), jnp.float32)
    wqkv = jax.random.normal(k_wq, (3 * C, C), jnp.float32) / math.sqrt(C)
    bqkv = 0.1 * jax.random.normal(k_bq, (3 * C, 1), jnp.float32)
    # NOTE: the PyTorch module zero-initializes proj_out (zero_module); small
    # deterministic random weights are used so the projection/residual path of
    # the kernel is actually exercised (set to zeros to match the real init).
    wproj = 0.1 * jax.random.normal(k_wp, (C, C), jnp.float32) / math.sqrt(C)
    bproj = 0.01 * jax.random.normal(k_bp, (C, 1), jnp.float32)
    params = (gmat, gamma, beta, wqkv, bqkv, wproj, bproj)

    out = jax.block_until_ready(attention_block(x, params, num_heads))
    ref = reference(x, params, num_heads)

    # Kernel feeds the MXU bf16 operands (f32 accumulation / f32 bookkeeping);
    # the reference is pure f32, so compare at a bf16-level tolerance.
    np.testing.assert_allclose(np.asarray(out), np.asarray(ref),
                               rtol=1e-2, atol=1e-2)
    print("KERNEL_OK")
</pallas_src>

<mosaic_0001>
module attributes {stable_mosaic.version = 11 : i64} {
  func.func @_attention_block_kernel(%arg0: i32, %arg1: memref<1x64x128xf32, #tpu.memory_space<vmem>>, %arg2: memref<64x64xf32, #tpu.memory_space<vmem>>, %arg3: memref<64x1xf32, #tpu.memory_space<vmem>>, %arg4: memref<64x1xf32, #tpu.memory_space<vmem>>, %arg5: memref<192x64xbf16, #tpu.memory_space<vmem>>, %arg6: memref<192x1xf32, #tpu.memory_space<vmem>>, %arg7: memref<64x64xbf16, #tpu.memory_space<vmem>>, %arg8: memref<64x1xf32, #tpu.memory_space<vmem>>, %arg9: memref<1x64x128xf32, #tpu.memory_space<vmem>>, %arg10: memref<192x128xbf16, #tpu.memory_space<vmem>>, %arg11: memref<64x128xbf16, #tpu.memory_space<vmem>>) attributes {dimension_semantics = [#tpu.dimension_semantics<parallel>], iteration_bounds = array<i64: 2>, scalar_prefetch = 0 : i64, scratch_operands = 2 : i64, tpu.core_type = #tpu.core_type<tc>, window_params = [{transform_indices = @transform_0, window_bounds = array<i64: 1, 64, 128>}, {pipeline_mode = #tpu.pipeline_mode<synchronous>, transform_indices = @transform_1, window_bounds = array<i64: 64, 64>}, {pipeline_mode = #tpu.pipeline_mode<synchronous>, transform_indices = @transform_2, window_bounds = array<i64: 64, 1>}, {pipeline_mode = #tpu.pipeline_mode<synchronous>, transform_indices = @transform_3, window_bounds = array<i64: 64, 1>}, {pipeline_mode = #tpu.pipeline_mode<synchronous>, transform_indices = @transform_4, window_bounds = array<i64: 192, 64>}, {pipeline_mode = #tpu.pipeline_mode<synchronous>, transform_indices = @transform_5, window_bounds = array<i64: 192, 1>}, {pipeline_mode = #tpu.pipeline_mode<synchronous>, transform_indices = @transform_6, window_bounds = array<i64: 64, 64>}, {pipeline_mode = #tpu.pipeline_mode<synchronous>, transform_indices = @transform_7, window_bounds = array<i64: 64, 1>}, {transform_indices = @transform_8, window_bounds = array<i64: 1, 64, 128>}]} {
    %c0 = arith.constant 0 : index
    %c0_0 = arith.constant 0 : index
    %c0_1 = arith.constant 0 : index
    %0 = vector.load %arg1[%c0, %c0_0, %c0_1] : memref<1x64x128xf32, #tpu.memory_space<vmem>>, vector<1x64x128xf32>
    %1 = vector.shape_cast %0 : vector<1x64x128xf32> to vector<64x128xf32>
    %cst = arith.constant dense<0.000000e+00> : vector<64xf32>
    %2 = vector.multi_reduction <add>, %1, %cst [1] : vector<64x128xf32> to vector<64xf32>
    %3 = vector.shape_cast %2 : vector<64xf32> to vector<64x1xf32>
    %4 = arith.mulf %1, %1 : vector<64x128xf32>
    %cst_2 = arith.constant dense<0.000000e+00> : vector<64xf32>
    %5 = vector.multi_reduction <add>, %4, %cst_2 [1] : vector<64x128xf32> to vector<64xf32>
    %6 = vector.shape_cast %5 : vector<64xf32> to vector<64x1xf32>
    %7 = tpu.concatenate %3, %6 in 1 : vector<64x1xf32>, vector<64x1xf32> -> vector<64x2xf32>
    %c0_3 = arith.constant 0 : index
    %c0_4 = arith.constant 0 : index
    %8 = vector.load %arg2[%c0_3, %c0_4] : memref<64x64xf32, #tpu.memory_space<vmem>>, vector<64x64xf32>
    %cst_5 = arith.constant dense<0.000000e+00> : vector<64x2xf32>
    %9 = tpu.matmul %8, %7, %cst_5 {dimension_numbers = #tpu.dot_dimension_numbers<[1], [0], [0], [1], [0, 0, 1, 1], [], []>} : vector<64x64xf32>, vector<64x2xf32>, vector<64x2xf32> -> vector<64x2xf32>
    %cst_6 = arith.constant 7.812500e-03 : f32
    %10 = vector.broadcast %cst_6 : f32 to vector<64x2xf32>
    %11 = arith.mulf %9, %10 : vector<64x2xf32>
    %12 = vector.extract_strided_slice %11 {offsets = [0, 0], sizes = [64, 1], strides = [1, 1]} : vector<64x2xf32> to vector<64x1xf32>
    %13 = vector.extract_strided_slice %11 {offsets = [0, 1], sizes = [64, 1], strides = [1, 1]} : vector<64x2xf32> to vector<64x1xf32>
    %14 = arith.mulf %12, %12 : vector<64x1xf32>
    %15 = arith.subf %13, %14 : vector<64x1xf32>
    %cst_7 = arith.constant 0.000000e+00 : f32
    %16 = vector.broadcast %cst_7 : f32 to vector<64x1xf32>
    %17 = arith.maximumf %15, %16 : vector<64x1xf32>
    %c0_8 = arith.constant 0 : index
    %c0_9 = arith.constant 0 : index
    %18 = vector.load %arg3[%c0_8, %c0_9] : memref<64x1xf32, #tpu.memory_space<vmem>>, vector<64x1xf32>
    %cst_10 = arith.constant 9.99999974E-6 : f32
    %19 = vector.broadcast %cst_10 : f32 to vector<64x1xf32>
    %20 = arith.addf %17, %19 : vector<64x1xf32>
    %21 = math.rsqrt %20 : vector<64x1xf32>
    %22 = arith.mulf %18, %21 : vector<64x1xf32>
    %c0_11 = arith.constant 0 : index
    %c0_12 = arith.constant 0 : index
    %23 = vector.load %arg4[%c0_11, %c0_12] : memref<64x1xf32, #tpu.memory_space<vmem>>, vector<64x1xf32>
    %24 = arith.mulf %12, %22 : vector<64x1xf32>
    %25 = arith.subf %23, %24 : vector<64x1xf32>
    %26 = vector.broadcast %22 : vector<64x1xf32> to vector<64x128xf32>
    %27 = arith.mulf %1, %26 : vector<64x128xf32>
    %28 = vector.broadcast %25 : vector<64x1xf32> to vector<64x128xf32>
    %29 = arith.addf %27, %28 : vector<64x128xf32>
    %30 = arith.truncf %29 : vector<64x128xf32> to vector<64x128xbf16>
    %c0_13 = arith.constant 0 : index
    %c0_14 = arith.constant 0 : index
    %31 = vector.load %arg5[%c0_13, %c0_14] : memref<192x64xbf16, #tpu.memory_space<vmem>>, vector<192x64xbf16>
    %cst_15 = arith.constant dense<0.000000e+00> : vector<192x128xf32>
    %32 = tpu.matmul %31, %30, %cst_15 {dimension_numbers = #tpu.dot_dimension_numbers<[1], [0], [0], [1], [0, 0, 1, 1], [], []>} : vector<192x64xbf16>, vector<64x128xbf16>, vector<192x128xf32> -> vector<192x128xf32>
    %c0_16 = arith.constant 0 : index
    %c0_17 = arith.constant 0 : index
    %33 = vector.load %arg6[%c0_16, %c0_17] : memref<192x1xf32, #tpu.memory_space<vmem>>, vector<192x1xf32>
    %34 = vector.broadcast %33 : vector<192x1xf32> to vector<192x128xf32>
    %35 = arith.addf %32, %34 : vector<192x128xf32>
    %36 = arith.truncf %35 : vector<192x128xf32> to vector<192x128xbf16>
    %c0_18 = arith.constant 0 : index
    %c0_19 = arith.constant 0 : index
    %37 = vector.load %arg10[%c0_18, %c0_19] : memref<192x128xbf16, #tpu.memory_space<vmem>>, vector<192x128xbf16>
    tpu.vector_store %arg10[%c0_18, %c0_19], %36 {strides = array<i32>} : memref<192x128xbf16, #tpu.memory_space<vmem>>, vector<192x128xbf16>,
    %c0_20 = arith.constant 0 : index
    %c0_21 = arith.constant 0 : index
    %38 = vector.load %arg10[%c0_20, %c0_21] : memref<192x128xbf16, #tpu.memory_space<vmem>>, vector<32x128xbf16>
    %cst_22 = arith.constant -1.000000e+30 : f32
    %39 = vector.broadcast %cst_22 : f32 to vector<1x128xf32>
    %cst_23 = arith.constant 0.000000e+00 : f32
    %40 = vector.broadcast %cst_23 : f32 to vector<1x128xf32>
    %cst_24 = arith.constant 0.000000e+00 : f32
    %41 = vector.broadcast %cst_24 : f32 to vector<32x128xf32>
    %c32 = arith.constant 32 : index
    %c0_25 = arith.constant 0 : index
    %42 = vector.load %arg10[%c32, %c0_25] : memref<192x128xbf16, #tpu.memory_space<vmem>>, vector<32x128xbf16>
    %c64 = arith.constant 64 : index
    %c0_26 = arith.constant 0 : index
    %43 = vector.load %arg10[%c64, %c0_26] : memref<192x128xbf16, #tpu.memory_space<vmem>>, vector<32x128xbf16>
    %cst_27 = arith.constant dense<0.000000e+00> : vector<128x128xf32>
    %44 = tpu.matmul %42, %38, %cst_27 {dimension_numbers = #tpu.dot_dimension_numbers<[0], [0], [1], [1], [0, 1, 1, 1], [], []>} : vector<32x128xbf16>, vector<32x128xbf16>, vector<128x128xf32> -> vector<128x128xf32>
    %45 = tpu.iota {dimensions = array<i32: 0>} : vector<128x1xi32>
    %c0_i32 = arith.constant 0 : i32
    %46 = vector.broadcast %c0_i32 : i32 to vector<128x1xi32>
    %47 = arith.addi %45, %46 : vector<128x1xi32>
    %c64_i32 = arith.constant 64 : i32
    %48 = vector.broadcast %c64_i32 : i32 to vector<128x1xi32>
    %49 = arith.cmpi slt, %47, %48 : vector<128x1xi32>
    %cst_28 = arith.constant 0.000000e+00 : f32
    %cst_29 = arith.constant -1.000000e+30 : f32
    %50 = vector.broadcast %cst_28 : f32 to vector<128x1xf32>
    %51 = vector.broadcast %cst_29 : f32 to vector<128x1xf32>
    %52 = arith.select %49, %50, %51 : vector<128x1xi1>, vector<128x1xf32>
    %53 = vector.broadcast %52 : vector<128x1xf32> to vector<128x128xf32>
    %54 = arith.addf %44, %53 : vector<128x128xf32>
    %cst_30 = arith.constant dense<0xFF800000> : vector<128xf32>
    %55 = vector.multi_reduction <maximumf>, %54, %cst_30 [0] : vector<128x128xf32> to vector<128xf32>
    %56 = vector.shape_cast %55 : vector<128xf32> to vector<1x128xf32>
    %57 = arith.maximumf %39, %56 : vector<1x128xf32>
    %58 = arith.subf %39, %57 : vector<1x128xf32>
    %59 = math.exp %58 : vector<1x128xf32>
    %60 = vector.broadcast %57 : vector<1x128xf32> to vector<128x128xf32>
    %61 = arith.subf %54, %60 : vector<128x128xf32>
    %62 = math.exp %61 : vector<128x128xf32>
    %63 = arith.mulf %59, %40 : vector<1x128xf32>
    %cst_31 = arith.constant dense<0.000000e+00> : vector<128xf32>
    %64 = vector.multi_reduction <add>, %62, %cst_31 [0] : vector<128x128xf32> to vector<128xf32>
    %65 = vector.shape_cast %64 : vector<128xf32> to vector<1x128xf32>
    %66 = arith.addf %63, %65 : vector<1x128xf32>
    %67 = vector.broadcast %59 : vector<1x128xf32> to vector<32x128xf32>
    %68 = arith.mulf %67, %41 : vector<32x128xf32>
    %69 = arith.truncf %62 : vector<128x128xf32> to vector<128x128xbf16>
    %cst_32 = arith.constant dense<0.000000e+00> : vector<32x128xf32>
    %70 = tpu.matmul %43, %69, %cst_32 {dimension_numbers = #tpu.dot_dimension_numbers<[1], [0], [0], [1], [0, 0, 1, 1], [], []>} : vector<32x128xbf16>, vector<128x128xbf16>, vector<32x128xf32> -> vector<32x128xf32>
    %71 = arith.addf %68, %70 : vector<32x128xf32>
    %72 = tpu.reciprocal %66 {approx = true} : vector<1x128xf32> -> vector<1x128xf32>
    %73 = vector.broadcast %72 : vector<1x128xf32> to vector<32x128xf32>
    %74 = arith.mulf %71, %73 : vector<32x128xf32>
    %75 = arith.truncf %74 : vector<32x128xf32> to vector<32x128xbf16>
    %c0_33 = arith.constant 0 : index
    %c0_34 = arith.constant 0 : index
    %76 = vector.load %arg11[%c0_33, %c0_34] : memref<64x128xbf16, #tpu.memory_space<vmem>>, vector<32x128xbf16>
    tpu.vector_store %arg11[%c0_33, %c0_34], %75 {strides = array<i32>} : memref<64x128xbf16, #tpu.memory_space<vmem>>, vector<32x128xbf16>,
    %c96 = arith.constant 96 : index
    %c0_35 = arith.constant 0 : index
    %77 = vector.load %arg10[%c96, %c0_35] : memref<192x128xbf16, #tpu.memory_space<vmem>>, vector<32x128xbf16>
    %cst_36 = arith.constant -1.000000e+30 : f32
    %78 = vector.broadcast %cst_36 : f32 to vector<1x128xf32>
    %cst_37 = arith.constant 0.000000e+00 : f32
    %79 = vector.broadcast %cst_37 : f32 to vector<1x128xf32>
    %cst_38 = arith.constant 0.000000e+00 : f32
    %80 = vector.broadcast %cst_38 : f32 to vector<32x128xf32>
    %c128 = arith.constant 128 : index
    %c0_39 = arith.constant 0 : index
    %81 = vector.load %arg10[%c128, %c0_39] : memref<192x128xbf16, #tpu.memory_space<vmem>>, vector<32x128xbf16>
    %c160 = arith.constant 160 : index
    %c0_40 = arith.constant 0 : index
    %82 = vector.load %arg10[%c160, %c0_40] : memref<192x128xbf16, #tpu.memory_space<vmem>>, vector<32x128xbf16>
    %cst_41 = arith.constant dense<0.000000e+00> : vector<128x128xf32>
    %83 = tpu.matmul %81, %77, %cst_41 {dimension_numbers = #tpu.dot_dimension_numbers<[0], [0], [1], [1], [0, 1, 1, 1], [], []>} : vector<32x128xbf16>, vector<32x128xbf16>, vector<128x128xf32> -> vector<128x128xf32>
    %84 = tpu.iota {dimensions = array<i32: 0>} : vector<128x1xi32>
    %c0_i32_42 = arith.constant 0 : i32
    %85 = vector.broadcast %c0_i32_42 : i32 to vector<128x1xi32>
    %86 = arith.addi %84, %85 : vector<128x1xi32>
    %c64_i32_43 = arith.constant 64 : i32
    %87 = vector.broadcast %c64_i32_43 : i32 to vector<128x1xi32>
    %88 = arith.cmpi slt, %86, %87 : vector<128x1xi32>
    %cst_44 = arith.constant 0.000000e+00 : f32
    %cst_45 = arith.constant -1.000000e+30 : f32
    %89 = vector.broadcast %cst_44 : f32 to vector<128x1xf32>
    %90 = vector.broadcast %cst_45 : f32 to vector<128x1xf32>
    %91 = arith.select %88, %89, %90 : vector<128x1xi1>, vector<128x1xf32>
    %92 = vector.broadcast %91 : vector<128x1xf32> to vector<128x128xf32>
    %93 = arith.addf %83, %92 : vector<128x128xf32>
    %cst_46 = arith.constant dense<0xFF800000> : vector<128xf32>
    %94 = vector.multi_reduction <maximumf>, %93, %cst_46 [0] : vector<128x128xf32> to vector<128xf32>
    %95 = vector.shape_cast %94 : vector<128xf32> to vector<1x128xf32>
    %96 = arith.maximumf %78, %95 : vector<1x128xf32>
    %97 = arith.subf %78, %96 : vector<1x128xf32>
    %98 = math.exp %97 : vector<1x128xf32>
    %99 = vector.broadcast %96 : vector<1x128xf32> to vector<128x128xf32>
    %100 = arith.subf %93, %99 : vector<128x128xf32>
    %101 = math.exp %100 : vector<128x128xf32>
    %102 = arith.mulf %98, %79 : vector<1x128xf32>
    %cst_47 = arith.constant dense<0.000000e+00> : vector<128xf32>
    %103 = vector.multi_reduction <add>, %101, %cst_47 [0] : vector<128x128xf32> to vector<128xf32>
    %104 = vector.shape_cast %103 : vector<128xf32> to vector<1x128xf32>
    %105 = arith.addf %102, %104 : vector<1x128xf32>
    %106 = vector.broadcast %98 : vector<1x128xf32> to vector<32x128xf32>
    %107 = arith.mulf %106, %80 : vector<32x128xf32>
    %108 = arith.truncf %101 : vector<128x128xf32> to vector<128x128xbf16>
    %cst_48 = arith.constant dense<0.000000e+00> : vector<32x128xf32>
    %109 = tpu.matmul %82, %108, %cst_48 {dimension_numbers = #tpu.dot_dimension_numbers<[1], [0], [0], [1], [0, 0, 1, 1], [], []>} : vector<32x128xbf16>, vector<128x128xbf16>, vector<32x128xf32> -> vector<32x128xf32>
    %110 = arith.addf %107, %109 : vector<32x128xf32>
    %111 = tpu.reciprocal %105 {approx = true} : vector<1x128xf32> -> vector<1x128xf32>
    %112 = vector.broadcast %111 : vector<1x128xf32> to vector<32x128xf32>
    %113 = arith.mulf %110, %112 : vector<32x128xf32>
    %114 = arith.truncf %113 : vector<32x128xf32> to vector<32x128xbf16>
    %c32_49 = arith.constant 32 : index
    %c0_50 = arith.constant 0 : index
    %115 = vector.load %arg11[%c32_49, %c0_50] : memref<64x128xbf16, #tpu.memory_space<vmem>>, vector<32x128xbf16>
    tpu.vector_store %arg11[%c32_49, %c0_50], %114 {strides = array<i32>} : memref<64x128xbf16, #tpu.memory_space<vmem>>, vector<32x128xbf16>,
    %c0_51 = arith.constant 0 : index
    %c0_52 = arith.constant 0 : index
    %116 = vector.load %arg7[%c0_51, %c0_52] : memref<64x64xbf16, #tpu.memory_space<vmem>>, vector<64x64xbf16>
    %c0_53 = arith.constant 0 : index
    %c0_54 = arith.constant 0 : index
    %117 = vector.load %arg11[%c0_53, %c0_54] : memref<64x128xbf16, #tpu.memory_space<vmem>>, vector<64x128xbf16>
    %cst_55 = arith.constant dense<0.000000e+00> : vector<64x128xf32>
    %118 = tpu.matmul %116, %117, %cst_55 {dimension_numbers = #tpu.dot_dimension_numbers<[1], [0], [0], [1], [0, 0, 1, 1], [], []>} : vector<64x64xbf16>, vector<64x128xbf16>, vector<64x128xf32> -> vector<64x128xf32>
    %c0_56 = arith.constant 0 : index
    %c0_57 = arith.constant 0 : index
    %c0_58 = arith.constant 0 : index
    %119 = vector.load %arg1[%c0_56, %c0_57, %c0_58] : memref<1x64x128xf32, #tpu.memory_space<vmem>>, vector<1x64x128xf32>
    %120 = vector.shape_cast %119 : vector<1x64x128xf32> to vector<64x128xf32>
    %121 = arith.addf %120, %118 : vector<64x128xf32>
    %c0_59 = arith.constant 0 : index
    %c0_60 = arith.constant 0 : index
    %122 = vector.load %arg8[%c0_59, %c0_60] : memref<64x1xf32, #tpu.memory_space<vmem>>, vector<64x1xf32>
    %123 = vector.broadcast %122 : vector<64x1xf32> to vector<64x128xf32>
    %124 = arith.addf %121, %123 : vector<64x128xf32>
    %c0_61 = arith.constant 0 : index
    %c0_62 = arith.constant 0 : index
    %c0_63 = arith.constant 0 : index
    %125 = vector.load %arg9[%c0_61, %c0_62, %c0_63] : memref<1x64x128xf32, #tpu.memory_space<vmem>>, vector<1x64x128xf32>
    %126 = vector.shape_cast %125 : vector<1x64x128xf32> to vector<64x128xf32>
    %127 = vector.shape_cast %124 : vector<64x128xf32> to vector<1x64x128xf32>
    tpu.vector_store %arg9[%c0_61, %c0_62, %c0_63], %127 {strides = array<i32>} : memref<1x64x128xf32, #tpu.memory_space<vmem>>, vector<1x64x128xf32>,
    return
  }
  func.func @transform_0(%arg0: i32) -> (i32, i32, i32) {
    %c0_i32 = arith.constant 0 : i32
    %c0_i32_0 = arith.constant 0 : i32
    %c0_i32_1 = arith.constant 0 : i32
    return %arg0, %c0_i32, %c0_i32_0 : i32, i32, i32
  }
  func.func @transform_1(%arg0: i32) -> (i32, i32) {
    %c0_i32 = arith.constant 0 : i32
    %c0_i32_0 = arith.constant 0 : i32
    %c0_i32_1 = arith.constant 0 : i32
    return %c0_i32, %c0_i32_0 : i32, i32
  }
  func.func @transform_2(%arg0: i32) -> (i32, i32) {
    %c0_i32 = arith.constant 0 : i32
    %c0_i32_0 = arith.constant 0 : i32
    %c0_i32_1 = arith.constant 0 : i32
    return %c0_i32, %c0_i32_0 : i32, i32
  }
  func.func @transform_3(%arg0: i32) -> (i32, i32) {
    %c0_i32 = arith.constant 0 : i32
    %c0_i32_0 = arith.constant 0 : i32
    %c0_i32_1 = arith.constant 0 : i32
    return %c0_i32, %c0_i32_0 : i32, i32
  }
  func.func @transform_4(%arg0: i32) -> (i32, i32) {
    %c0_i32 = arith.constant 0 : i32
    %c0_i32_0 = arith.constant 0 : i32
    %c0_i32_1 = arith.constant 0 : i32
    return %c0_i32, %c0_i32_0 : i32, i32
  }
  func.func @transform_5(%arg0: i32) -> (i32, i32) {
    %c0_i32 = arith.constant 0 : i32
    %c0_i32_0 = arith.constant 0 : i32
    %c0_i32_1 = arith.constant 0 : i32
    return %c0_i32, %c0_i32_0 : i32, i32
  }
  func.func @transform_6(%arg0: i32) -> (i32, i32) {
    %c0_i32 = arith.constant 0 : i32
    %c0_i32_0 = arith.constant 0 : i32
    %c0_i32_1 = arith.constant 0 : i32
    return %c0_i32, %c0_i32_0 : i32, i32
  }
  func.func @transform_7(%arg0: i32) -> (i32, i32) {
    %c0_i32 = arith.constant 0 : i32
    %c0_i32_0 = arith.constant 0 : i32
    %c0_i32_1 = arith.constant 0 : i32
    return %c0_i32, %c0_i32_0 : i32, i32
  }
  func.func @transform_8(%arg0: i32) -> (i32, i32, i32) {
    %c0_i32 = arith.constant 0 : i32
    %c0_i32_0 = arith.constant 0 : i32
    %c0_i32_1 = arith.constant 0 : i32
    return %arg0, %c0_i32, %c0_i32_0 : i32, i32, i32
  }
}

</mosaic_0001>

<llo_original>
// kernel: tpu_custom_call.1
$region0: #{tpu_custom_call.1}
  #allocation0 [shape = 'u32[]', space=smem, size = 0x4, offset = 0x4, fixed_abs, tag = 'smem constant byte address 0x4 - core index']
  #allocation1 [shape = 'u32[144,128]{1,0:T(1,128)}', space=vmem, size = 0x12000, scoped, tag = 'internal scratch']
  #allocation2 [shape = 'bf16[192,128]{1,0:T(16,128)(2,1)}', space=vmem, size = 0xc000, scoped, tag = 'scratch operand']
  #allocation3 [shape = 'bf16[64,128]{1,0:T(16,128)(2,1)}', space=vmem, size = 0x4000, scoped, tag = 'scratch operand']
  %s0 = inlined_call_operand.vmem [shape: f32[2,64,128], index: 0, kind: input, shape index: {}]
  %s1 = inlined_call_operand.vmem [shape: f32[64,64], index: 1, kind: input, shape index: {}]
  %s2 = inlined_call_operand.vmem [shape: f32[64,1], index: 2, kind: input, shape index: {}]
  %s3 = inlined_call_operand.vmem [shape: f32[64,1], index: 3, kind: input, shape index: {}]
  %s4 = inlined_call_operand.vmem [shape: bf16[192,64], index: 4, kind: input, shape index: {}]
  %s5 = inlined_call_operand.vmem [shape: f32[192,1], index: 5, kind: input, shape index: {}]
  %s6 = inlined_call_operand.vmem [shape: bf16[64,64], index: 6, kind: input, shape index: {}]
  %s7 = inlined_call_operand.vmem [shape: f32[64,1], index: 7, kind: input, shape index: {}]
  %s8 = inlined_call_operand.hbm [shape: f32[2,64,128], index: 8, kind: output, shape index: {}]
  %s9 = sld [smem:[#allocation0]]
  $region65: #{tpu_custom_call.1} parent=0
    _
  %s11 = ssub.s32 1, %s9
  %s12 = scalar_select 0, %s11, %s9
  $region1: #{tpu_custom_call.1} parent=0
    #allocation4 [shape = 'u8[65536]{0}', space=vmem, size = 0x10000, scoped, tag = 'output window, operand 0']
    #allocation5 [shape = 's32[2]{0}', space=sflag, size = 0x8, scoped, tag = 'scoped memory for tpu_custom_call.1']
    %13 = vsyncpa [#allocation5], 0
    %s14 = scalar_lea.sflag [#allocation5], 1
    %15 = vsyncpa %s14, 0
    loop: start=0, step=1, limit=4
    $region2: #{tpu_custom_call.1} parent=1 // loop_pre_header
      _
    $region3: #{tpu_custom_call.1} parent=1 // loop_header
      %s17 = sphi 0, %s21
      %p18 = scmp.ge.s32.totalorder %s17, 4
      %s27 = sphi 0, %s29
      %s30 = sphi 0, %s27
      %s31 = sphi 0, %s30
      %s47 = sphi 0, %s31
      %s51 = sphi 0, %s51
      %s53 = sphi 0, %s51
      %s54 = sphi 0, %s53
      %s68 = sphi 0, %s54
      %s72 = sphi 0, %s72
      %s74 = sphi 0, %s72
      %s75 = sphi 0, %s74
      %s89 = sphi 0, %s75
      %s93 = sphi 0, %s93
      %s95 = sphi 0, %s93
      %s96 = sphi 0, %s95
      %s110 = sphi 0, %s96
      %s114 = sphi 0, %s114
      %s116 = sphi 0, %s114
      %s117 = sphi 0, %s116
      %s131 = sphi 0, %s117
      %s135 = sphi 0, %s135
      %s137 = sphi 0, %s135
      %s138 = sphi 0, %s137
      %s152 = sphi 0, %s138
      %s156 = sphi 0, %s156
      %s158 = sphi 0, %s156
      %s159 = sphi 0, %s158
      %s173 = sphi 0, %s159
      %s177 = sphi 0, %s177
      %s179 = sphi 0, %s177
      %s180 = sphi 0, %s179
      %s194 = sphi 0, %s180
      %s200 = sphi 0, %s202
      %s203 = sphi 0, %s200
      %s204 = sphi 0, %s203
      %s220 = sphi 0, %s204
    $region4: #{tpu_custom_call.1} parent=1 // loop_header_branch
      %20 = sbr.rel (%p18) target = $region8
    $region5: #{tpu_custom_call.1} parent=1 // loop_body
      %s22 = ssub.s32 %s17, 1
      %s23 = ssub.s32 %s17, 2
      %s24 = sadd.s32 %s17, 1
      %s25 = ssub.s32 %s17, %s24
      %p26 = scmp.eq.s32.totalorder %s25, 0
      %s28 = sadd.s32 %s27, 1
      %s29 = scalar_select %p26, %s27, %s28
      %p32 = pneg %p26
      %p33 = scmp.eq.s32.totalorder %s17, 1
      %p34 = por %p32, %p33
      %p35 = scmp.ne.s32.totalorder %s27, %s30
      %p36 = scmp.eq.s32.totalorder %s17, 0
      %p37 = por %p35, %p36
      %p38 = scmp.ne.s32.totalorder %s27, %s30
      %p39 = scmp.eq.s32.totalorder %s22, 1
      %p40 = por %p38, %p39
      %p41 = scmp.ne.s32.totalorder %s30, %s31
      %p42 = scmp.eq.s32.totalorder %s22, 0
      %p43 = por %p41, %p42
      %p44 = scmp.ne.s32.totalorder %s30, %s31
      %p45 = scmp.eq.s32.totalorder %s23, 1
      %p46 = por %p44, %p45
      %p48 = scmp.ne.s32.totalorder %s31, %s47
      %p49 = scmp.eq.s32.totalorder %s23, 0
      %p50 = por %p48, %p49
      %s52 = sadd.s32 %s51, 1
      %p55 = scmp.eq.s32.totalorder %s17, 1
      %p56 = scmp.ne.s32.totalorder %s51, %s53
      %p57 = scmp.eq.s32.totalorder %s17, 0
      %p58 = por %p56, %p57
      %p59 = scmp.ne.s32.totalorder %s51, %s53
      %p60 = scmp.eq.s32.totalorder %s22, 1
      %p61 = por %p59, %p60
      %p62 = scmp.ne.s32.totalorder %s53, %s54
      %p63 = scmp.eq.s32.totalorder %s22, 0
      %p64 = por %p62, %p63
      %p65 = scmp.ne.s32.totalorder %s53, %s54
      %p66 = scmp.eq.s32.totalorder %s23, 1
      %p67 = por %p65, %p66
      %p69 = scmp.ne.s32.totalorder %s54, %s68
      %p70 = scmp.eq.s32.totalorder %s23, 0
      %p71 = por %p69, %p70
      %s73 = sadd.s32 %s72, 1
      %p76 = scmp.eq.s32.totalorder %s17, 1
      %p77 = scmp.ne.s32.totalorder %s72, %s74
      %p78 = scmp.eq.s32.totalorder %s17, 0
      %p79 = por %p77, %p78
      %p80 = scmp.ne.s32.totalorder %s72, %s74
      %p81 = scmp.eq.s32.totalorder %s22, 1
      %p82 = por %p80, %p81
      %p83 = scmp.ne.s32.totalorder %s74, %s75
      %p84 = scmp.eq.s32.totalorder %s22, 0
      %p85 = por %p83, %p84
      %p86 = scmp.ne.s32.totalorder %s74, %s75
      %p87 = scmp.eq.s32.totalorder %s23, 1
      %p88 = por %p86, %p87
      %p90 = scmp.ne.s32.totalorder %s75, %s89
      %p91 = scmp.eq.s32.totalorder %s23, 0
      %p92 = por %p90, %p91
      %s94 = sadd.s32 %s93, 1
      %p97 = scmp.eq.s32.totalorder %s17, 1
      %p98 = scmp.ne.s32.totalorder %s93, %s95
      %p99 = scmp.eq.s32.totalorder %s17, 0
      %p100 = por %p98, %p99
      %p101 = scmp.ne.s32.totalorder %s93, %s95
      %p102 = scmp.eq.s32.totalorder %s22, 1
      %p103 = por %p101, %p102
      %p104 = scmp.ne.s32.totalorder %s95, %s96
      %p105 = scmp.eq.s32.totalorder %s22, 0
      %p106 = por %p104, %p105
      %p107 = scmp.ne.s32.totalorder %s95, %s96
      %p108 = scmp.eq.s32.totalorder %s23, 1
      %p109 = por %p107, %p108
      %p111 = scmp.ne.s32.totalorder %s96, %s110
      %p112 = scmp.eq.s32.totalorder %s23, 0
      %p113 = por %p111, %p112
      %s115 = sadd.s32 %s114, 1
      %p118 = scmp.eq.s32.totalorder %s17, 1
      %p119 = scmp.ne.s32.totalorder %s114, %s116
      %p120 = scmp.eq.s32.totalorder %s17, 0
      %p121 = por %p119, %p120
      %p122 = scmp.ne.s32.totalorder %s114, %s116
      %p123 = scmp.eq.s32.totalorder %s22, 1
      %p124 = por %p122, %p123
      %p125 = scmp.ne.s32.totalorder %s116, %s117
      %p126 = scmp.eq.s32.totalorder %s22, 0
      %p127 = por %p125, %p126
      %p128 = scmp.ne.s32.totalorder %s116, %s117
      %p129 = scmp.eq.s32.totalorder %s23, 1
      %p130 = por %p128, %p129
      %p132 = scmp.ne.s32.totalorder %s117, %s131
      %p133 = scmp.eq.s32.totalorder %s23, 0
      %p134 = por %p132, %p133
      %s136 = sadd.s32 %s135, 1
      %p139 = scmp.eq.s32.totalorder %s17, 1
      %p140 = scmp.ne.s32.totalorder %s135, %s137
      %p141 = scmp.eq.s32.totalorder %s17, 0
      %p142 = por %p140, %p141
      %p143 = scmp.ne.s32.totalorder %s135, %s137
      %p144 = scmp.eq.s32.totalorder %s22, 1
      %p145 = por %p143, %p144
      %p146 = scmp.ne.s32.totalorder %s137, %s138
      %p147 = scmp.eq.s32.totalorder %s22, 0
      %p148 = por %p146, %p147
      %p149 = scmp.ne.s32.totalorder %s137, %s138
      %p150 = scmp.eq.s32.totalorder %s23, 1
      %p151 = por %p149, %p150
      %p153 = scmp.ne.s32.totalorder %s138, %s152
      %p154 = scmp.eq.s32.totalorder %s23, 0
      %p155 = por %p153, %p154
      %s157 = sadd.s32 %s156, 1
      %p160 = scmp.eq.s32.totalorder %s17, 1
      %p161 = scmp.ne.s32.totalorder %s156, %s158
      %p162 = scmp.eq.s32.totalorder %s17, 0
      %p163 = por %p161, %p162
      %p164 = scmp.ne.s32.totalorder %s156, %s158
      %p165 = scmp.eq.s32.totalorder %s22, 1
      %p166 = por %p164, %p165
      %p167 = scmp.ne.s32.totalorder %s158, %s159
      %p168 = scmp.eq.s32.totalorder %s22, 0
      %p169 = por %p167, %p168
      %p170 = scmp.ne.s32.totalorder %s158, %s159
      %p171 = scmp.eq.s32.totalorder %s23, 1
      %p172 = por %p170, %p171
      %p174 = scmp.ne.s32.totalorder %s159, %s173
      %p175 = scmp.eq.s32.totalorder %s23, 0
      %p176 = por %p174, %p175
      %s178 = sadd.s32 %s177, 1
      %p181 = scmp.eq.s32.totalorder %s17, 1
      %p182 = scmp.ne.s32.totalorder %s177, %s179
      %p183 = scmp.eq.s32.totalorder %s17, 0
      %p184 = por %p182, %p183
      %p185 = scmp.ne.s32.totalorder %s177, %s179
      %p186 = scmp.eq.s32.totalorder %s22, 1
      %p187 = por %p185, %p186
      %p188 = scmp.ne.s32.totalorder %s179, %s180
      %p189 = scmp.eq.s32.totalorder %s22, 0
      %p190 = por %p188, %p189
      %p191 = scmp.ne.s32.totalorder %s179, %s180
      %p192 = scmp.eq.s32.totalorder %s23, 1
      %p193 = por %p191, %p192
      %p195 = scmp.ne.s32.totalorder %s180, %s194
      %p196 = scmp.eq.s32.totalorder %s23, 0
      %p197 = por %p195, %p196
      %s198 = ssub.s32 %s17, %s24
      %p199 = scmp.eq.s32.totalorder %s198, 0
      %s201 = sadd.s32 %s200, 1
      %s202 = scalar_select %p199, %s200, %s201
      %p205 = pneg %p199
      %p206 = scmp.eq.s32.totalorder %s17, 1
      %p207 = por %p205, %p206
      %p208 = scmp.ne.s32.totalorder %s200, %s203
      %p209 = scmp.eq.s32.totalorder %s17, 0
      %p210 = por %p208, %p209
      %p211 = scmp.ne.s32.totalorder %s200, %s203
      %p212 = scmp.eq.s32.totalorder %s22, 1
      %p213 = por %p211, %p212
      %p214 = scmp.ne.s32.totalorder %s203, %s204
      %p215 = scmp.eq.s32.totalorder %s22, 0
      %p216 = por %p214, %p215
      %p217 = scmp.ne.s32.totalorder %s203, %s204
      %p218 = scmp.eq.s32.totalorder %s23, 1
      %p219 = por %p217, %p218
      %p221 = scmp.ne.s32.totalorder %s204, %s220
      %p222 = scmp.eq.s32.totalorder %s23, 0
      %p223 = por %p221, %p222
      %p224 = scmp.le.s32.totalorder 1, %s17
      %p225 = scmp.lt.s32.totalorder %s17, 3
      %p226 = pnand %p224, %p225
      %p227 = pneg %p226
      // Predicated region
      $region9: #{tpu_custom_call.1} parent=5 // pred_check
        _
      $region10: #{tpu_custom_call.1} parent=5 // pred_check_branch
        %229 = sbr.rel (%p226) target = $region12
      $region11: #{tpu_custom_call.1} parent=5 // pred_region
        %s230 = ssub.s32 %s17, 1
        // Predicated region
        $region13: #{tpu_custom_call.1} parent=11 // pred_check
          %p231 = pneg %p64
        $region14: #{tpu_custom_call.1} parent=11 // pred_check_branch
          %233 = sbr.rel (%p231) target = $region16
        $region15: #{tpu_custom_call.1} parent=11 // pred_region
          _
        $region16: #{tpu_custom_call.1} parent=11 // pred_fallthru
          _
        // Predicated region
        $region17: #{tpu_custom_call.1} parent=11 // pred_check
          %p234 = pneg %p85
        $region18: #{tpu_custom_call.1} parent=11 // pred_check_branch
          %236 = sbr.rel (%p234) target = $region20
        $region19: #{tpu_custom_call.1} parent=11 // pred_region
          _
        $region20: #{tpu_custom_call.1} parent=11 // pred_fallthru
          _
        // Predicated region
        $region21: #{tpu_custom_call.1} parent=11 // pred_check
          %p237 = pneg %p106
        $region22: #{tpu_custom_call.1} parent=11 // pred_check_branch
          %239 = sbr.rel (%p237) target = $region24
        $region23: #{tpu_custom_call.1} parent=11 // pred_region
          _
        $region24: #{tpu_custom_call.1} parent=11 // pred_fallthru
          _
        // Predicated region
        $region25: #{tpu_custom_call.1} parent=11 // pred_check
          %p240 = pneg %p127
        $region26: #{tpu_custom_call.1} parent=11 // pred_check_branch
          %242 = sbr.rel (%p240) target = $region28
        $region27: #{tpu_custom_call.1} parent=11 // pred_region
          _
        $region28: #{tpu_custom_call.1} parent=11 // pred_fallthru
          _
        // Predicated region
        $region29: #{tpu_custom_call.1} parent=11 // pred_check
          %p243 = pneg %p148
        $region30: #{tpu_custom_call.1} parent=11 // pred_check_branch
          %245 = sbr.rel (%p243) target = $region32
        $region31: #{tpu_custom_call.1} parent=11 // pred_region
          _
        $region32: #{tpu_custom_call.1} parent=11 // pred_fallthru
          _
        // Predicated region
        $region33: #{tpu_custom_call.1} parent=11 // pred_check
          %p246 = pneg %p169
        $region34: #{tpu_custom_call.1} parent=11 // pred_check_branch
          %248 = sbr.rel (%p246) target = $region36
        $region35: #{tpu_custom_call.1} parent=11 // pred_region
          _
        $region36: #{tpu_custom_call.1} parent=11 // pred_fallthru
          _
        // Predicated region
        $region37: #{tpu_custom_call.1} parent=11 // pred_check
          %p249 = pneg %p190
        $region38: #{tpu_custom_call.1} parent=11 // pred_check_branch
          %251 = sbr.rel (%p249) target = $region40
        $region39: #{tpu_custom_call.1} parent=11 // pred_region
          _
        $region40: #{tpu_custom_call.1} parent=11 // pred_fallthru
          _
      $region12: #{tpu_custom_call.1} parent=5 // pred_fallthru
        _
      %p252 = scmp.lt.s32.totalorder %s17, 2
      // Predicated region
      $region41: #{tpu_custom_call.1} parent=5 // pred_check
        %p253 = pneg %p252
      $region42: #{tpu_custom_call.1} parent=5 // pred_check_branch
        %255 = sbr.rel (%p253) target = $region44
      $region43: #{tpu_custom_call.1} parent=5 // pred_region
        // Predicated region
        $region45: #{tpu_custom_call.1} parent=43 // pred_check
          %p256 = pneg %p37
        $region46: #{tpu_custom_call.1} parent=43 // pred_check_branch
          %258 = sbr.rel (%p256) target = $region48
        $region47: #{tpu_custom_call.1} parent=43 // pred_region
          %p259 = scmp.lt.s32.totalorder %s17, 1
          %s260 = scalar_select %p259, %s17, 1
          %s261 = smul.addr %s260, 8
          %s262 = smul.addr %s261, 8
          %s263 = scalar_lea.vmem %s0, %s262
        $region48: #{tpu_custom_call.1} parent=43 // pred_fallthru
          _
      $region44: #{tpu_custom_call.1} parent=5 // pred_fallthru
        _
      %p264 = scmp.le.s32.totalorder 1, %s17
      %p265 = scmp.lt.s32.totalorder %s17, 3
      %p266 = pnand %p264, %p265
      %p267 = pneg %p266
      // Predicated region
      $region49: #{tpu_custom_call.1} parent=5 // pred_check
        _
      $region50: #{tpu_custom_call.1} parent=5 // pred_check_branch
        %269 = sbr.rel (%p266) target = $region52
      $region51: #{tpu_custom_call.1} parent=5 // pred_region
        %s270 = ssub.s32 %s17, 1
        %p271 = scmp.lt.s32.totalorder %s22, 1
        %s272 = scalar_select %p271, %s22, 1
        %s273 = smul.addr %s272, 8
        %s274 = smul.addr %s273, 8
        %s275 = scalar_lea.vmem %s0, %s274
        %p276 = pneg %p43
        %p277 = pneg %p40
        %p278 = pneg %p64
        %p279 = pneg %p61
        %p280 = pneg %p85
        %p281 = pneg %p82
        %p282 = pneg %p106
        %p283 = pneg %p103
        %p284 = pneg %p127
        %p285 = pneg %p124
        %p286 = pneg %p148
        %p287 = pneg %p145
        %p288 = pneg %p169
        %p289 = pneg %p166
        %p290 = pneg %p190
        %p291 = pneg %p187
        %p292 = pneg %p216
        %p293 = pneg %p213
        %s294 = sand.u32 %s203, 1
        %s295 = scalar_lea.sflag [#allocation5], %s294
        %s296 = sand.u32 %s203, 1
        %s297 = smul.addr %s296, 64
        %s298 = scalar_lea.vmem [#allocation4], %s297
        %p299 = scmp.lt.s32.totalorder %s22, 1
        %s300 = scalar_select %p299, %s22, 1
        %s301 = smul.addr %s300, 8
        %s302 = smul.addr %s301, 8
        %s303 = scalar_lea.vmem %s0, %s302
        %v305 = vld [vmem:[%s303] sm:$0xff]
        %v306 = vld [vmem:[%s303 + $0x8] sm:$0xff]
        %v307 = vld [vmem:[%s303 + $0x10] sm:$0xff]
        %v308 = vld [vmem:[%s303 + $0x18] sm:$0xff]
        %v309 = vld [vmem:[%s303 + $0x20] sm:$0xff]
        %v310 = vld [vmem:[%s303 + $0x28] sm:$0xff]
        %v311 = vld [vmem:[%s303 + $0x30] sm:$0xff]
        %v312 = vld [vmem:[%s303 + $0x38] sm:$0xff]
        %313 = vadd.xlane.f32.xlu0 %v305
        %v314 = vpop.xlane.xlu0 %313
        %315 = vadd.xlane.f32.xlu0 %v306
        %v316 = vpop.xlane.xlu0 %315
        %317 = vadd.xlane.f32.xlu0 %v307
        %v318 = vpop.xlane.xlu0 %317
        %319 = vadd.xlane.f32.xlu0 %v308
        %v320 = vpop.xlane.xlu0 %319
        %321 = vadd.xlane.f32.xlu0 %v309
        %v322 = vpop.xlane.xlu0 %321
        %323 = vadd.xlane.f32.xlu0 %v310
        %v324 = vpop.xlane.xlu0 %323
        %325 = vadd.xlane.f32.xlu0 %v311
        %v326 = vpop.xlane.xlu0 %325
        %327 = vadd.xlane.f32.xlu0 %v312
        %v328 = vpop.xlane.xlu0 %327
        %v329 = vmul.f32 %v305, %v305
        %v330 = vmul.f32 %v306, %v306
        %v331 = vmul.f32 %v307, %v307
        %v332 = vmul.f32 %v308, %v308
        %v333 = vmul.f32 %v309, %v309
        %v334 = vmul.f32 %v310, %v310
        %v335 = vmul.f32 %v311, %v311
        %v336 = vmul.f32 %v312, %v312
        %337 = vadd.xlane.f32.xlu0 %v329
        %v338 = vpop.xlane.xlu0 %337
        %339 = vadd.xlane.f32.xlu0 %v330
        %v340 = vpop.xlane.xlu0 %339
        %341 = vadd.xlane.f32.xlu0 %v331
        %v342 = vpop.xlane.xlu0 %341
        %343 = vadd.xlane.f32.xlu0 %v332
        %v344 = vpop.xlane.xlu0 %343
        %345 = vadd.xlane.f32.xlu0 %v333
        %v346 = vpop.xlane.xlu0 %345
        %347 = vadd.xlane.f32.xlu0 %v334
        %v348 = vpop.xlane.xlu0 %347
        %349 = vadd.xlane.f32.xlu0 %v335
        %v350 = vpop.xlane.xlu0 %349
        %351 = vadd.xlane.f32.xlu0 %v336
        %v352 = vpop.xlane.xlu0 %351
        %vm353 = vcmask 7168
        %v354 = vsel %vm353, %v314, %v338
        %v355 = vsel %vm353, %v316, %v340
        %v356 = vsel %vm353, %v318, %v342
        %v357 = vsel %vm353, %v320, %v344
        %v358 = vsel %vm353, %v322, %v346
        %v359 = vsel %vm353, %v324, %v348
        %v360 = vsel %vm353, %v326, %v350
        %v361 = vsel %vm353, %v328, %v352
        %v362 = vld [vmem:[%s1] sm:$0xff]
        %v363 = vld [vmem:[%s1 + $0x8] sm:$0xff]
        %v364 = vld [vmem:[%s1 + $0x10] sm:$0xff]
        %v365 = vld [vmem:[%s1 + $0x18] sm:$0xff]
        %v366 = vld [vmem:[%s1 + $0x20] sm:$0xff]
        %v367 = vld [vmem:[%s1 + $0x28] sm:$0xff]
        %v368 = vld [vmem:[%s1 + $0x30] sm:$0xff]
        %v369 = vld [vmem:[%s1 + $0x38] sm:$0xff]
        %vm370 = vcmask 523264
        %v372 = vsel %vm370, %v362, 0
        %v375 = vsel %vm370, %v363, 0
        %v378 = vsel %vm370, %v364, 0
        %v381 = vsel %vm370, %v365, 0
        %v384 = vsel %vm370, %v366, 0
        %v387 = vsel %vm370, %v367, 0
        %v390 = vsel %vm370, %v368, 0
        %v393 = vsel %vm370, %v369, 0
        %395 = vmatprep.subr.mxu0 0.0
        %396 = vmatpush1.msra.mxu0 %v354
        %397 = vmatprep.subr.mxu0 0.0
        %398 = vmatpush1.msra.mxu0 %v355
        %399 = vmatprep.subr.mxu0 0.0
        %400 = vmatpush1.msra.mxu0 %v356
        %401 = vmatprep.subr.mxu0 0.0
        %402 = vmatpush1.msra.mxu0 %v357
        %403 = vmatprep.subr.mxu0 0.0
        %404 = vmatpush1.msra.mxu0 %v358
        %405 = vmatprep.subr.mxu0 0.0
        %406 = vmatpush1.msra.mxu0 %v359
        %407 = vmatprep.subr.mxu0 0.0
        %408 = vmatpush1.msra.mxu0 %v360
        %409 = vmatprep.subr.mxu0 0.0
        %410 = vmatpush1.msra.mxu0 %v361
        %411 = vmatprep.subr.mxu0 0.0
        %412 = vmatpush1.msra.mxu0 0.0
        %413 = vmatprep.subr.mxu0 0.0
        %414 = vmatpush1.msra.mxu0 0.0
        %415 = vmatprep.subr.mxu0 0.0
        %416 = vmatpush1.msra.mxu0 0.0
        %417 = vmatprep.subr.mxu0 0.0
        %418 = vmatpush1.msra.mxu0 0.0
        %419 = vmatprep.subr.mxu0 0.0
        %420 = vmatpush1.msra.mxu0 0.0
        %421 = vmatprep.subr.mxu0 0.0
        %422 = vmatpush1.msra.mxu0 0.0
        %423 = vmatprep.subr.mxu0 0.0
        %424 = vmatpush1.msra.mxu0 0.0
        %425 = vmatprep.subr.mxu0 0.0
        %426 = vmatpush1.msra.mxu0 0.0
        %427 = vmatprep.subr.mxu0 0.0
        %428 = vmatpush1.msra.mxu0 0.0
        %429 = vmatprep.subr.mxu0 0.0
        %430 = vmatpush1.msra.mxu0 0.0
        %431 = vmatprep.subr.mxu0 0.0
        %432 = vmatpush1.msra.mxu0 0.0
        %433 = vmatprep.subr.mxu0 0.0
        %434 = vmatpush1.msra.mxu0 0.0
        %435 = vmatprep.subr.mxu0 0.0
        %436 = vmatpush1.msra.mxu0 0.0
        %437 = vmatprep.subr.mxu0 0.0
        %438 = vmatpush1.msra.mxu0 0.0
        %439 = vmatprep.subr.mxu0 0.0
        %440 = vmatpush1.msra.mxu0 0.0
        %441 = vmatprep.subr.mxu0 0.0
        %442 = vmatpush1.msra.mxu0 0.0
        %443 = vmatprep.subr.mxu0 0.0
        %444 = vmatpush1.msra.mxu0 0.0
        %445 = vmatprep.subr.mxu0 0.0
        %446 = vmatpush1.msra.mxu0 0.0
        %447 = vmatprep.subr.mxu0 0.0
        %448 = vmatpush1.msra.mxu0 0.0
        %449 = vmatprep.subr.mxu0 0.0
        %450 = vmatpush1.msra.mxu0 0.0
        %451 = vmatprep.subr.mxu0 0.0
        %452 = vmatpush1.msra.mxu0 0.0
        %453 = vmatprep.subr.mxu0 0.0
        %454 = vmatpush1.msra.mxu0 0.0
        %455 = vmatprep.subr.mxu0 0.0
        %456 = vmatpush1.msra.mxu0 0.0
        %457 = vmatprep.subr.mxu0 0.0
        %458 = vmatpush1.msra.mxu0 0.0
        %459 = vmatprep.mubr.f32.mxu0 0.0
        %460 = vmatmul.mubr.f32.gmra.mrb[0].mxu0 %v372
        %v461 = vpop.f32.mrb[0].mxu0
        %v462 = vadd.f32 0.0, %v461
        %v463 = vpop.f32.mrb[0].mxu0
        %464 = vmatprep.mubr.f32.mxu0 0.0
        %465 = vmatmul.mubr.f32.gmra.mrb[0].mxu0 %v375
        %v466 = vpop.f32.mrb[0].mxu0
        %v467 = vadd.f32 0.0, %v466
        %v468 = vpop.f32.mrb[0].mxu0
        %469 = vmatprep.mubr.f32.mxu0 0.0
        %470 = vmatmul.mubr.f32.gmra.mrb[0].mxu0 %v378
        %v471 = vpop.f32.mrb[0].mxu0
        %v472 = vadd.f32 0.0, %v471
        %v473 = vpop.f32.mrb[0].mxu0
        %474 = vmatprep.mubr.f32.mxu0 0.0
        %475 = vmatmul.mubr.f32.gmra.mrb[0].mxu0 %v381
        %v476 = vpop.f32.mrb[0].mxu0
        %v477 = vadd.f32 0.0, %v476
        %v478 = vpop.f32.mrb[0].mxu0
        %479 = vmatprep.mubr.f32.mxu0 0.0
        %480 = vmatmul.mubr.f32.gmra.mrb[0].mxu0 %v384
        %v481 = vpop.f32.mrb[0].mxu0
        %v482 = vadd.f32 0.0, %v481
        %v483 = vpop.f32.mrb[0].mxu0
        %484 = vmatprep.mubr.f32.mxu0 0.0
        %485 = vmatmul.mubr.f32.gmra.mrb[0].mxu0 %v387
        %v486 = vpop.f32.mrb[0].mxu0
        %v487 = vadd.f32 0.0, %v486
        %v488 = vpop.f32.mrb[0].mxu0
        %489 = vmatprep.mubr.f32.mxu0 0.0
        %490 = vmatmul.mubr.f32.gmra.mrb[0].mxu0 %v390
        %v491 = vpop.f32.mrb[0].mxu0
        %v492 = vadd.f32 0.0, %v491
        %v493 = vpop.f32.mrb[0].mxu0
        %494 = vmatprep.mubr.f32.mxu0 0.0
        %495 = vmatmul.mubr.f32.gmra.mrb[0].mxu0 %v393
        %v496 = vpop.f32.mrb[0].mxu0
        %v497 = vadd.f32 0.0, %v496
        %v498 = vpop.f32.mrb[0].mxu0
        %499 = vdwg.mxu0
        %v500 = vmul.f32 %v462, 0.0078125
        %v501 = vmul.f32 %v467, 0.0078125
        %v502 = vmul.f32 %v472, 0.0078125
        %v503 = vmul.f32 %v477, 0.0078125
        %v504 = vmul.f32 %v482, 0.0078125
        %v505 = vmul.f32 %v487, 0.0078125
        %v506 = vmul.f32 %v492, 0.0078125
        %v507 = vmul.f32 %v497, 0.0078125
        %v508 = vmul.f32 %v500, %v500
        %v509 = vmul.f32 %v501, %v501
        %v510 = vmul.f32 %v502, %v502
        %v511 = vmul.f32 %v503, %v503
        %v512 = vmul.f32 %v504, %v504
        %v513 = vmul.f32 %v505, %v505
        %v514 = vmul.f32 %v506, %v506
        %v515 = vmul.f32 %v507, %v507
        %524 = vrot.lane.b32.xlu0 %v508, 1
        %v525 = vpop.permute.xlu0 %524
        %526 = vrot.lane.b32.xlu0 %v509, 1
        %v527 = vpop.permute.xlu0 %526
        %528 = vrot.lane.b32.xlu0 %v510, 1
        %v529 = vpop.permute.xlu0 %528
        %530 = vrot.lane.b32.xlu0 %v511, 1
        %v531 = vpop.permute.xlu0 %530
        %532 = vrot.lane.b32.xlu0 %v512, 1
        %v533 = vpop.permute.xlu0 %532
        %534 = vrot.lane.b32.xlu0 %v513, 1
        %v535 = vpop.permute.xlu0 %534
        %536 = vrot.lane.b32.xlu0 %v514, 1
        %v537 = vpop.permute.xlu0 %536
        %538 = vrot.lane.b32.xlu0 %v515, 1
        %v539 = vpop.permute.xlu0 %538
        %v548 = vsub.f32 %v500, %v525
        %v549 = vsub.f32 %v501, %v527
        %v550 = vsub.f32 %v502, %v529
        %v551 = vsub.f32 %v503, %v531
        %v552 = vsub.f32 %v504, %v533
        %v553 = vsub.f32 %v505, %v535
        %v554 = vsub.f32 %v506, %v537
        %v555 = vsub.f32 %v507, %v539
        %v556 = vmax.f32 %v548, 0.0
        %v557 = vmax.f32 %v549, 0.0
        %v558 = vmax.f32 %v550, 0.0
        %v559 = vmax.f32 %v551, 0.0
        %v560 = vmax.f32 %v552, 0.0
        %v561 = vmax.f32 %v553, 0.0
        %v562 = vmax.f32 %v554, 0.0
        %v563 = vmax.f32 %v555, 0.0
        %v564 = vld [vmem:[%s2] sm:$0xff]
        %v565 = vld [vmem:[%s2 + $0x8] sm:$0xff]
        %v566 = vld [vmem:[%s2 + $0x10] sm:$0xff]
        %v567 = vld [vmem:[%s2 + $0x18] sm:$0xff]
        %v568 = vld [vmem:[%s2 + $0x20] sm:$0xff]
        %v569 = vld [vmem:[%s2 + $0x28] sm:$0xff]
        %v570 = vld [vmem:[%s2 + $0x30] sm:$0xff]
        %v571 = vld [vmem:[%s2 + $0x38] sm:$0xff]
        %v572 = vadd.f32 %v556, 1e-05
        %v573 = vadd.f32 %v557, 1e-05
        %v574 = vadd.f32 %v558, 1e-05
        %v575 = vadd.f32 %v559, 1e-05
        %v576 = vadd.f32 %v560, 1e-05
        %v577 = vadd.f32 %v561, 1e-05
        %v578 = vadd.f32 %v562, 1e-05
        %v579 = vadd.f32 %v563, 1e-05
        %v580 = vrsqrt.pop %v572
        %v581 = vrsqrt.pop %v573
        %v582 = vrsqrt.pop %v574
        %v583 = vrsqrt.pop %v575
        %v584 = vrsqrt.pop %v576
        %v585 = vrsqrt.pop %v577
        %v586 = vrsqrt.pop %v578
        %v587 = vrsqrt.pop %v579
        %596 = vrot.lane.b32.xlu0 %v580, 127
        %v597 = vpop.permute.xlu0 %596
        %598 = vrot.lane.b32.xlu0 %v581, 127
        %v599 = vpop.permute.xlu0 %598
        %600 = vrot.lane.b32.xlu0 %v582, 127
        %v601 = vpop.permute.xlu0 %600
        %602 = vrot.lane.b32.xlu0 %v583, 127
        %v603 = vpop.permute.xlu0 %602
        %604 = vrot.lane.b32.xlu0 %v584, 127
        %v605 = vpop.permute.xlu0 %604
        %606 = vrot.lane.b32.xlu0 %v585, 127
        %v607 = vpop.permute.xlu0 %606
        %608 = vrot.lane.b32.xlu0 %v586, 127
        %v609 = vpop.permute.xlu0 %608
        %610 = vrot.lane.b32.xlu0 %v587, 127
        %v611 = vpop.permute.xlu0 %610
        %v620 = vmul.f32 %v564, %v597
        %v621 = vmul.f32 %v565, %v599
        %v622 = vmul.f32 %v566, %v601
        %v623 = vmul.f32 %v567, %v603
        %v624 = vmul.f32 %v568, %v605
        %v625 = vmul.f32 %v569, %v607
        %v626 = vmul.f32 %v570, %v609
        %v627 = vmul.f32 %v571, %v611
        %v628 = vld [vmem:[%s3] sm:$0xff]
        %v629 = vld [vmem:[%s3 + $0x8] sm:$0xff]
        %v630 = vld [vmem:[%s3 + $0x10] sm:$0xff]
        %v631 = vld [vmem:[%s3 + $0x18] sm:$0xff]
        %v632 = vld [vmem:[%s3 + $0x20] sm:$0xff]
        %v633 = vld [vmem:[%s3 + $0x28] sm:$0xff]
        %v634 = vld [vmem:[%s3 + $0x30] sm:$0xff]
        %v635 = vld [vmem:[%s3 + $0x38] sm:$0xff]
        %v636 = vmul.f32 %v500, %v620
        %v637 = vmul.f32 %v501, %v621
        %v638 = vmul.f32 %v502, %v622
        %v639 = vmul.f32 %v503, %v623
        %v640 = vmul.f32 %v504, %v624
        %v641 = vmul.f32 %v505, %v625
        %v642 = vmul.f32 %v506, %v626
        %v643 = vmul.f32 %v507, %v627
        %v644 = vsub.f32 %v628, %v636
        %v645 = vsub.f32 %v629, %v637
        %v646 = vsub.f32 %v630, %v638
        %v647 = vsub.f32 %v631, %v639
        %v648 = vsub.f32 %v632, %v640
        %v649 = vsub.f32 %v633, %v641
        %v650 = vsub.f32 %v634, %v642
        %v651 = vsub.f32 %v635, %v643
        %653 = vset.pattern.permute.xlu0 0
        %654 = vperm.xlu0 %653, %v620
        %v655 = vpop.permute.xlu0 %654
        %658 = vset.pattern.permute.xlu0 0
        %659 = vperm.xlu0 %658, %v621
        %v660 = vpop.permute.xlu0 %659
        %663 = vset.pattern.permute.xlu0 0
        %664 = vperm.xlu0 %663, %v622
        %v665 = vpop.permute.xlu0 %664
        %668 = vset.pattern.permute.xlu0 0
        %669 = vperm.xlu0 %668, %v623
        %v670 = vpop.permute.xlu0 %669
        %673 = vset.pattern.permute.xlu0 0
        %674 = vperm.xlu0 %673, %v624
        %v675 = vpop.permute.xlu0 %674
        %678 = vset.pattern.permute.xlu0 0
        %679 = vperm.xlu0 %678, %v625
        %v680 = vpop.permute.xlu0 %679
        %683 = vset.pattern.permute.xlu0 0
        %684 = vperm.xlu0 %683, %v626
        %v685 = vpop.permute.xlu0 %684
        %688 = vset.pattern.permute.xlu0 0
        %689 = vperm.xlu0 %688, %v627
        %v690 = vpop.permute.xlu0 %689
        %v692 = vmul.f32 %v305, %v655
        %v693 = vmul.f32 %v306, %v660
        %v694 = vmul.f32 %v307, %v665
        %v695 = vmul.f32 %v308, %v670
        %v696 = vmul.f32 %v309, %v675
        %v697 = vmul.f32 %v310, %v680
        %v698 = vmul.f32 %v311, %v685
        %v699 = vmul.f32 %v312, %v690
        %701 = vset.pattern.permute.xlu0 0
        %702 = vperm.xlu0 %701, %v644
        %v703 = vpop.permute.xlu0 %702
        %706 = vset.pattern.permute.xlu0 0
        %707 = vperm.xlu0 %706, %v645
        %v708 = vpop.permute.xlu0 %707
        %711 = vset.pattern.permute.xlu0 0
        %712 = vperm.xlu0 %711, %v646
        %v713 = vpop.permute.xlu0 %712
        %716 = vset.pattern.permute.xlu0 0
        %717 = vperm.xlu0 %716, %v647
        %v718 = vpop.permute.xlu0 %717
        %721 = vset.pattern.permute.xlu0 0
        %722 = vperm.xlu0 %721, %v648
        %v723 = vpop.permute.xlu0 %722
        %726 = vset.pattern.permute.xlu0 0
        %727 = vperm.xlu0 %726, %v649
        %v728 = vpop.permute.xlu0 %727
        %731 = vset.pattern.permute.xlu0 0
        %732 = vperm.xlu0 %731, %v650
        %v733 = vpop.permute.xlu0 %732
        %736 = vset.pattern.permute.xlu0 0
        %737 = vperm.xlu0 %736, %v651
        %v738 = vpop.permute.xlu0 %737
        %v740 = vadd.f32 %v692, %v703
        %v741 = vadd.f32 %v693, %v708
        %v742 = vadd.f32 %v694, %v713
        %v743 = vadd.f32 %v695, %v718
        %v744 = vadd.f32 %v696, %v723
        %v745 = vadd.f32 %v697, %v728
        %v746 = vadd.f32 %v698, %v733
        %v747 = vadd.f32 %v699, %v738
        %v748 = vpack.c.bf16 %v741, %v740
        %v749 = vpack.c.bf16 %v743, %v742
        %v750 = vpack.c.bf16 %v745, %v744
        %v751 = vpack.c.bf16 %v747, %v746
        %v752 = vld [vmem:[%s4] sm:$0xf]
        %v753 = vld [vmem:[%s4 + $0x4] sm:$0xf]
        %v754 = vld [vmem:[%s4 + $0x8] sm:$0xf]
        %v755 = vld [vmem:[%s4 + $0xc] sm:$0xf]
        %v756 = vld [vmem:[%s4 + $0x10] sm:$0xf]
        %v757 = vld [vmem:[%s4 + $0x14] sm:$0xf]
        %v758 = vld [vmem:[%s4 + $0x18] sm:$0xf]
        %v759 = vld [vmem:[%s4 + $0x1c] sm:$0xf]
        %v760 = vld [vmem:[%s4 + $0x20] sm:$0xf]
        %v761 = vld [vmem:[%s4 + $0x24] sm:$0xf]
        %v762 = vld [vmem:[%s4 + $0x28] sm:$0xf]
        %v763 = vld [vmem:[%s4 + $0x2c] sm:$0xf]
        %v764 = vld [vmem:[%s4 + $0x30] sm:$0xf]
        %v765 = vld [vmem:[%s4 + $0x34] sm:$0xf]
        %v766 = vld [vmem:[%s4 + $0x38] sm:$0xf]
        %v767 = vld [vmem:[%s4 + $0x3c] sm:$0xf]
        %v768 = vld [vmem:[%s4 + $0x40] sm:$0xf]
        %v769 = vld [vmem:[%s4 + $0x44] sm:$0xf]
        %v770 = vld [vmem:[%s4 + $0x48] sm:$0xf]
        %v771 = vld [vmem:[%s4 + $0x4c] sm:$0xf]
        %v772 = vld [vmem:[%s4 + $0x50] sm:$0xf]
        %v773 = vld [vmem:[%s4 + $0x54] sm:$0xf]
        %v774 = vld [vmem:[%s4 + $0x58] sm:$0xf]
        %v775 = vld [vmem:[%s4 + $0x5c] sm:$0xf]
        %v776 = vld [vmem:[%s5] sm:$0xff]
        %v777 = vld [vmem:[%s5 + $0x8] sm:$0xff]
        %v778 = vld [vmem:[%s5 + $0x10] sm:$0xff]
        %v779 = vld [vmem:[%s5 + $0x18] sm:$0xff]
        %v780 = vld [vmem:[%s5 + $0x20] sm:$0xff]
        %v781 = vld [vmem:[%s5 + $0x28] sm:$0xff]
        %v782 = vld [vmem:[%s5 + $0x30] sm:$0xff]
        %v783 = vld [vmem:[%s5 + $0x38] sm:$0xff]
        %v784 = vld [vmem:[%s5 + $0x40] sm:$0xff]
        %v785 = vld [vmem:[%s5 + $0x48] sm:$0xff]
        %v786 = vld [vmem:[%s5 + $0x50] sm:$0xff]
        %v787 = vld [vmem:[%s5 + $0x58] sm:$0xff]
        %v788 = vld [vmem:[%s5 + $0x60] sm:$0xff]
        %v789 = vld [vmem:[%s5 + $0x68] sm:$0xff]
        %v790 = vld [vmem:[%s5 + $0x70] sm:$0xff]
        %v791 = vld [vmem:[%s5 + $0x78] sm:$0xff]
        %v792 = vld [vmem:[%s5 + $0x80] sm:$0xff]
        %v793 = vld [vmem:[%s5 + $0x88] sm:$0xff]
        %v794 = vld [vmem:[%s5 + $0x90] sm:$0xff]
        %v795 = vld [vmem:[%s5 + $0x98] sm:$0xff]
        %v796 = vld [vmem:[%s5 + $0xa0] sm:$0xff]
        %v797 = vld [vmem:[%s5 + $0xa8] sm:$0xff]
        %v798 = vld [vmem:[%s5 + $0xb0] sm:$0xff]
        %v799 = vld [vmem:[%s5 + $0xb8] sm:$0xff]
        %801 = vset.pattern.permute.xlu0 0
        %802 = vperm.xlu0 %801, %v776
        %v803 = vpop.permute.xlu0 %802
        %806 = vset.pattern.permute.xlu0 0
        %807 = vperm.xlu0 %806, %v777
        %v808 = vpop.permute.xlu0 %807
        %811 = vset.pattern.permute.xlu0 0
        %812 = vperm.xlu0 %811, %v778
        %v813 = vpop.permute.xlu0 %812
        %816 = vset.pattern.permute.xlu0 0
        %817 = vperm.xlu0 %816, %v779
        %v818 = vpop.permute.xlu0 %817
        %821 = vset.pattern.permute.xlu0 0
        %822 = vperm.xlu0 %821, %v780
        %v823 = vpop.permute.xlu0 %822
        %826 = vset.pattern.permute.xlu0 0
        %827 = vperm.xlu0 %826, %v781
        %v828 = vpop.permute.xlu0 %827
        %831 = vset.pattern.permute.xlu0 0
        %832 = vperm.xlu0 %831, %v782
        %v833 = vpop.permute.xlu0 %832
        %836 = vset.pattern.permute.xlu0 0
        %837 = vperm.xlu0 %836, %v783
        %v838 = vpop.permute.xlu0 %837
        %841 = vset.pattern.permute.xlu0 0
        %842 = vperm.xlu0 %841, %v784
        %v843 = vpop.permute.xlu0 %842
        %846 = vset.pattern.permute.xlu0 0
        %847 = vperm.xlu0 %846, %v785
        %v848 = vpop.permute.xlu0 %847
        %851 = vset.pattern.permute.xlu0 0
        %852 = vperm.xlu0 %851, %v786
        %v853 = vpop.permute.xlu0 %852
        %856 = vset.pattern.permute.xlu0 0
        %857 = vperm.xlu0 %856, %v787
        %v858 = vpop.permute.xlu0 %857
        %861 = vset.pattern.permute.xlu0 0
        %862 = vperm.xlu0 %861, %v788
        %v863 = vpop.permute.xlu0 %862
        %866 = vset.pattern.permute.xlu0 0
        %867 = vperm.xlu0 %866, %v789
        %v868 = vpop.permute.xlu0 %867
        %871 = vset.pattern.permute.xlu0 0
        %872 = vperm.xlu0 %871, %v790
        %v873 = vpop.permute.xlu0 %872
        %876 = vset.pattern.permute.xlu0 0
        %877 = vperm.xlu0 %876, %v791
        %v878 = vpop.permute.xlu0 %877
        %881 = vset.pattern.permute.xlu0 0
        %882 = vperm.xlu0 %881, %v792
        %v883 = vpop.permute.xlu0 %882
        %886 = vset.pattern.permute.xlu0 0
        %887 = vperm.xlu0 %886, %v793
        %v888 = vpop.permute.xlu0 %887
        %891 = vset.pattern.permute.xlu0 0
        %892 = vperm.xlu0 %891, %v794
        %v893 = vpop.permute.xlu0 %892
        %896 = vset.pattern.permute.xlu0 0
        %897 = vperm.xlu0 %896, %v795
        %v898 = vpop.permute.xlu0 %897
        %901 = vset.pattern.permute.xlu0 0
        %902 = vperm.xlu0 %901, %v796
        %v903 = vpop.permute.xlu0 %902
        %906 = vset.pattern.permute.xlu0 0
        %907 = vperm.xlu0 %906, %v797
        %v908 = vpop.permute.xlu0 %907
        %911 = vset.pattern.permute.xlu0 0
        %912 = vperm.xlu0 %911, %v798
        %v913 = vpop.permute.xlu0 %912
        %916 = vset.pattern.permute.xlu0 0
        %917 = vperm.xlu0 %916, %v799
        %v918 = vpop.permute.xlu0 %917
        %v944 = vunpack.c.l.b16 %v752
        %v945 = vunpack.c.l.b16 %v753
        %v946 = vunpack.c.l.b16 %v754
        %v947 = vunpack.c.l.b16 %v755
        %v948 = vunpack.c.l.b16 %v756
        %v949 = vunpack.c.l.b16 %v757
        %v950 = vunpack.c.l.b16 %v758
        %v951 = vunpack.c.l.b16 %v759
        %v952 = vunpack.c.l.b16 %v760
        %v953 = vunpack.c.l.b16 %v761
        %v954 = vunpack.c.l.b16 %v762
        %v955 = vunpack.c.l.b16 %v763
        %v956 = vunpack.c.l.b16 %v764
        %v957 = vunpack.c.l.b16 %v765
        %v958 = vunpack.c.l.b16 %v766
        %v959 = vunpack.c.l.b16 %v767
        %v960 = vunpack.c.l.b16 %v768
        %v961 = vunpack.c.l.b16 %v769
        %v962 = vunpack.c.l.b16 %v770
        %v963 = vunpack.c.l.b16 %v771
        %v964 = vunpack.c.l.b16 %v772
        %v965 = vunpack.c.l.b16 %v773
        %v966 = vunpack.c.l.b16 %v774
        %v967 = vunpack.c.l.b16 %v775
        %v968 = vpack.c.b16 %v945, %v944
        %v969 = vpack.c.b16 %v947, %v946
        %v970 = vpack.c.b16 %v949, %v948
        %v971 = vpack.c.b16 %v951, %v950
        %v972 = vpack.c.b16 %v953, %v952
        %v973 = vpack.c.b16 %v955, %v954
        %v974 = vpack.c.b16 %v957, %v956
        %v975 = vpack.c.b16 %v959, %v958
        %v976 = vpack.c.b16 %v961, %v960
        %v977 = vpack.c.b16 %v963, %v962
        %v978 = vpack.c.b16 %v965, %v964
        %v979 = vpack.c.b16 %v967, %v966
        %v981 = vsel %vm370, %v968, 0
        %v984 = vsel %vm370, %v969, 0
        %v987 = vsel %vm370, %v970, 0
        %v990 = vsel %vm370, %v971, 0
        %v993 = vsel %vm370, %v972, 0
        %v996 = vsel %vm370, %v973, 0
        %v999 = vsel %vm370, %v974, 0
        %v1002 = vsel %vm370, %v975, 0
        %v1005 = vsel %vm370, %v976, 0
        %v1008 = vsel %vm370, %v977, 0
        %v1011 = vsel %vm370, %v978, 0
        %v1014 = vsel %vm370, %v979, 0
        %1016 = vmatprep.subr.bf16.mxu0 0
        %1017 = vmatpush1.bf16.msra.mxu0 %v748
        %1018 = vmatprep.subr.bf16.mxu0 0
        %1019 = vmatpush1.bf16.msra.mxu0 %v749
        %1020 = vmatprep.subr.bf16.mxu0 0
        %1021 = vmatpush1.bf16.msra.mxu0 %v750
        %1022 = vmatprep.subr.bf16.mxu0 0
        %1023 = vmatpush1.bf16.msra.mxu0 %v751
        %1024 = vmatprep.subr.bf16.mxu0 0
        %1025 = vmatpush1.bf16.msra.mxu0 0
        %1026 = vmatprep.subr.bf16.mxu0 0
        %1027 = vmatpush1.bf16.msra.mxu0 0
        %1028 = vmatprep.subr.bf16.mxu0 0
        %1029 = vmatpush1.bf16.msra.mxu0 0
        %1030 = vmatprep.subr.bf16.mxu0 0
        %1031 = vmatpush1.bf16.msra.mxu0 0
        %1032 = vmatprep.subr.bf16.mxu0 0
        %1033 = vmatpush1.bf16.msra.mxu0 0
        %1034 = vmatprep.subr.bf16.mxu0 0
        %1035 = vmatpush1.bf16.msra.mxu0 0
        %1036 = vmatprep.subr.bf16.mxu0 0
        %1037 = vmatpush1.bf16.msra.mxu0 0
        %1038 = vmatprep.subr.bf16.mxu0 0
        %1039 = vmatpush1.bf16.msra.mxu0 0
        %1040 = vmatprep.subr.bf16.mxu0 0
        %1041 = vmatpush1.bf16.msra.mxu0 0
        %1042 = vmatprep.subr.bf16.mxu0 0
        %1043 = vmatpush1.bf16.msra.mxu0 0
        %1044 = vmatprep.subr.bf16.mxu0 0
        %1045 = vmatpush1.bf16.msra.mxu0 0
        %1046 = vmatprep.subr.bf16.mxu0 0
        %1047 = vmatpush1.bf16.msra.mxu0 0
        %1048 = vmatprep.mubr.bf16.mxu0 0
        %1049 = vmatmul.mubr.bf16.gmra.mrb[0].mxu0 %v981
        %v1050 = vpop.f32.mrb[0].mxu0
        %v1051 = vadd.f32 %v803, %v1050
        %v1052 = vpop.f32.mrb[0].mxu0
        %v1053 = vpop.f32.mrb[0].mxu0
        %v1054 = vadd.f32 %v808, %v1053
        %v1055 = vpop.f32.mrb[0].mxu0
        %1056 = vmatprep.mubr.bf16.mxu0 0
        %1057 = vmatmul.mubr.bf16.gmra.mrb[0].mxu0 %v984
        %v1058 = vpop.f32.mrb[0].mxu0
        %v1059 = vadd.f32 %v813, %v1058
        %v1060 = vpop.f32.mrb[0].mxu0
        %v1061 = vpop.f32.mrb[0].mxu0
        %v1062 = vadd.f32 %v818, %v1061
        %v1063 = vpop.f32.mrb[0].mxu0
        %1064 = vmatprep.mubr.bf16.mxu0 0
        %1065 = vmatmul.mubr.bf16.gmra.mrb[0].mxu0 %v987
        %v1066 = vpop.f32.mrb[0].mxu0
        %v1067 = vadd.f32 %v823, %v1066
        %v1068 = vpop.f32.mrb[0].mxu0
        %v1069 = vpop.f32.mrb[0].mxu0
        %v1070 = vadd.f32 %v828, %v1069
        %v1071 = vpop.f32.mrb[0].mxu0
        %1072 = vmatprep.mubr.bf16.mxu0 0
        %1073 = vmatmul.mubr.bf16.gmra.mrb[0].mxu0 %v990
        %v1074 = vpop.f32.mrb[0].mxu0
        %v1075 = vadd.f32 %v833, %v1074
        %v1076 = vpop.f32.mrb[0].mxu0
        %v1077 = vpop.f32.mrb[0].mxu0
        %v1078 = vadd.f32 %v838, %v1077
        %v1079 = vpop.f32.mrb[0].mxu0
        %1080 = vmatprep.mubr.bf16.mxu0 0
        %1081 = vmatmul.mubr.bf16.gmra.mrb[0].mxu0 %v993
        %v1082 = vpop.f32.mrb[0].mxu0
        %v1083 = vadd.f32 %v843, %v1082
        %v1084 = vpop.f32.mrb[0].mxu0
        %v1085 = vpop.f32.mrb[0].mxu0
        %v1086 = vadd.f32 %v848, %v1085
        %v1087 = vpop.f32.mrb[0].mxu0
        %1088 = vmatprep.mubr.bf16.mxu0 0
        %1089 = vmatmul.mubr.bf16.gmra.mrb[0].mxu0 %v996
        %v1090 = vpop.f32.mrb[0].mxu0
        %v1091 = vadd.f32 %v853, %v1090
        %v1092 = vpop.f32.mrb[0].mxu0
        %v1093 = vpop.f32.mrb[0].mxu0
        %v1094 = vadd.f32 %v858, %v1093
        %v1095 = vpop.f32.mrb[0].mxu0
        %1096 = vmatprep.mubr.bf16.mxu0 0
        %1097 = vmatmul.mubr.bf16.gmra.mrb[0].mxu0 %v999
        %v1098 = vpop.f32.mrb[0].mxu0
        %v1099 = vadd.f32 %v863, %v1098
        %v1100 = vpop.f32.mrb[0].mxu0
        %v1101 = vpop.f32.mrb[0].mxu0
        %v1102 = vadd.f32 %v868, %v1101
        %v1103 = vpop.f32.mrb[0].mxu0
        %1104 = vmatprep.mubr.bf16.mxu0 0
        %1105 = vmatmul.mubr.bf16.gmra.mrb[0].mxu0 %v1002
        %v1106 = vpop.f32.mrb[0].mxu0
        %v1107 = vadd.f32 %v873, %v1106
        %v1108 = vpop.f32.mrb[0].mxu0
        %v1109 = vpop.f32.mrb[0].mxu0
        %v1110 = vadd.f32 %v878, %v1109
        %v1111 = vpop.f32.mrb[0].mxu0
        %1112 = vmatprep.mubr.bf16.mxu0 0
        %1113 = vmatmul.mubr.bf16.gmra.mrb[0].mxu0 %v1005
        %v1114 = vpop.f32.mrb[0].mxu0
        %v1115 = vadd.f32 %v883, %v1114
        %v1116 = vpop.f32.mrb[0].mxu0
        %v1117 = vpop.f32.mrb[0].mxu0
        %v1118 = vadd.f32 %v888, %v1117
        %v1119 = vpop.f32.mrb[0].mxu0
        %1120 = vmatprep.mubr.bf16.mxu0 0
        %1121 = vmatmul.mubr.bf16.gmra.mrb[0].mxu0 %v1008
        %v1122 = vpop.f32.mrb[0].mxu0
        %v1123 = vadd.f32 %v893, %v1122
        %v1124 = vpop.f32.mrb[0].mxu0
        %v1125 = vpop.f32.mrb[0].mxu0
        %v1126 = vadd.f32 %v898, %v1125
        %v1127 = vpop.f32.mrb[0].mxu0
        %1128 = vmatprep.mubr.bf16.mxu0 0
        %1129 = vmatmul.mubr.bf16.gmra.mrb[0].mxu0 %v1011
        %v1130 = vpop.f32.mrb[0].mxu0
        %v1131 = vadd.f32 %v903, %v1130
        %v1132 = vpop.f32.mrb[0].mxu0
        %v1133 = vpop.f32.mrb[0].mxu0
        %v1134 = vadd.f32 %v908, %v1133
        %v1135 = vpop.f32.mrb[0].mxu0
        %1136 = vmatprep.mubr.bf16.mxu0 0
        %1137 = vmatmul.mubr.bf16.gmra.mrb[0].mxu0 %v1014
        %v1138 = vpop.f32.mrb[0].mxu0
        %v1139 = vadd.f32 %v913, %v1138
        %v1140 = vpop.f32.mrb[0].mxu0
        %v1141 = vpop.f32.mrb[0].mxu0
        %v1142 = vadd.f32 %v918, %v1141
        %v1143 = vpop.f32.mrb[0].mxu0
        %1144 = vdwg.mxu0
        %v1145 = vpack.c.bf16 %v1054, %v1051
        %v1146 = vpack.c.bf16 %v1062, %v1059
        %v1147 = vpack.c.bf16 %v1070, %v1067
        %v1148 = vpack.c.bf16 %v1078, %v1075
        %v1149 = vpack.c.bf16 %v1086, %v1083
        %v1150 = vpack.c.bf16 %v1094, %v1091
        %v1151 = vpack.c.bf16 %v1102, %v1099
        %v1152 = vpack.c.bf16 %v1110, %v1107
        %v1153 = vpack.c.bf16 %v1118, %v1115
        %v1154 = vpack.c.bf16 %v1126, %v1123
        %v1155 = vpack.c.bf16 %v1134, %v1131
        %v1156 = vpack.c.bf16 %v1142, %v1139
        %1157 = vst [vmem:[#allocation2] sm:$0xff] %v1145
        %1158 = vst [vmem:[#allocation2 + $0x8] sm:$0xff] %v1146
        %1159 = vst [vmem:[#allocation2 + $0x10] sm:$0xff] %v1147
        %1160 = vst [vmem:[#allocation2 + $0x18] sm:$0xff] %v1148
        %1161 = vst [vmem:[#allocation2 + $0x20] sm:$0xff] %v1149
        %1162 = vst [vmem:[#allocation2 + $0x28] sm:$0xff] %v1150
        %1163 = vst [vmem:[#allocation2 + $0x30] sm:$0xff] %v1151
        %1164 = vst [vmem:[#allocation2 + $0x38] sm:$0xff] %v1152
        %1165 = vst [vmem:[#allocation2 + $0x40] sm:$0xff] %v1153
        %1166 = vst [vmem:[#allocation2 + $0x48] sm:$0xff] %v1154
        %1167 = vst [vmem:[#allocation2 + $0x50] sm:$0xff] %v1155
        %1168 = vst [vmem:[#allocation2 + $0x58] sm:$0xff] %v1156
        %v1169 = vld [vmem:[#allocation2] sm:$0xff]
        %v1170 = vld [vmem:[#allocation2 + $0x8] sm:$0xff]
        %v1171 = vld [vmem:[#allocation2 + $0x10] sm:$0xff]
        %v1172 = vld [vmem:[#allocation2 + $0x18] sm:$0xff]
        %v1173 = vld [vmem:[#allocation2 + $0x20] sm:$0xff]
        %v1174 = vld [vmem:[#allocation2 + $0x28] sm:$0xff]
        %v1175 = vlaneseq
        %v1176 = vshrl.u32 %v1175, 7
        %v1177 = vadd.s32 %v1176, 8
        %v1178 = vadd.s32 %v1176, 16
        %v1179 = vadd.s32 %v1176, 24
        %v1180 = vadd.s32 %v1176, 32
        %v1181 = vadd.s32 %v1176, 40
        %v1182 = vadd.s32 %v1176, 48
        %v1183 = vadd.s32 %v1176, 56
        %v1184 = vadd.s32 %v1176, 64
        %v1185 = vadd.s32 %v1176, 72
        %v1186 = vadd.s32 %v1176, 80
        %v1187 = vadd.s32 %v1176, 88
        %v1188 = vadd.s32 %v1176, 96
        %v1189 = vadd.s32 %v1176, 104
        %v1190 = vadd.s32 %v1176, 112
        %v1191 = vadd.s32 %v1176, 120
        %vm1192 = vcmp.lt.s32.totalorder %v1176, 64
        %vm1193 = vcmp.lt.s32.totalorder %v1177, 64
        %vm1194 = vcmp.lt.s32.totalorder %v1178, 64
        %vm1195 = vcmp.lt.s32.totalorder %v1179, 64
        %vm1196 = vcmp.lt.s32.totalorder %v1180, 64
        %vm1197 = vcmp.lt.s32.totalorder %v1181, 64
        %vm1198 = vcmp.lt.s32.totalorder %v1182, 64
        %vm1199 = vcmp.lt.s32.totalorder %v1183, 64
        %vm1200 = vcmp.lt.s32.totalorder %v1184, 64
        %vm1201 = vcmp.lt.s32.totalorder %v1185, 64
        %vm1202 = vcmp.lt.s32.totalorder %v1186, 64
        %vm1203 = vcmp.lt.s32.totalorder %v1187, 64
        %vm1204 = vcmp.lt.s32.totalorder %v1188, 64
        %vm1205 = vcmp.lt.s32.totalorder %v1189, 64
        %vm1206 = vcmp.lt.s32.totalorder %v1190, 64
        %vm1207 = vcmp.lt.s32.totalorder %v1191, 64
        %v1208 = vsel %vm1192, 0.0, -1e+30
        %v1209 = vsel %vm1193, 0.0, -1e+30
        %v1210 = vsel %vm1194, 0.0, -1e+30
        %v1211 = vsel %vm1195, 0.0, -1e+30
        %v1212 = vsel %vm1196, 0.0, -1e+30
        %v1213 = vsel %vm1197, 0.0, -1e+30
        %v1214 = vsel %vm1198, 0.0, -1e+30
        %v1215 = vsel %vm1199, 0.0, -1e+30
        %v1216 = vsel %vm1200, 0.0, -1e+30
        %v1217 = vsel %vm1201, 0.0, -1e+30
        %v1218 = vsel %vm1202, 0.0, -1e+30
        %v1219 = vsel %vm1203, 0.0, -1e+30
        %v1220 = vsel %vm1204, 0.0, -1e+30
        %v1221 = vsel %vm1205, 0.0, -1e+30
        %v1222 = vsel %vm1206, 0.0, -1e+30
        %v1223 = vsel %vm1207, 0.0, -1e+30
        %1224 = vxpose.xlu0.c.b16.start [1/8] %v1171, 128
        %1225 = vxpose.xlu0.c.b16.cont [2/8] %v1172, 128
        %1226 = vxpose.xlu0.c.b16.cont [3/8] 0, 128
        %1227 = vxpose.xlu0.c.b16.cont [4/8] 0, 128
        %1228 = vxpose.xlu0.c.b16.cont [5/8] 0, 128
        %1229 = vxpose.xlu0.c.b16.cont [6/8] 0, 128
        %1230 = vxpose.xlu0.c.b16.cont [7/8] 0, 128
        %1231 = vxpose.xlu0.c.b16.end [8/8] 0, 128
        %v1232 = vpop.trf.xlu0
        %v1233 = vpop.trf.xlu0
        %v1234 = vpop.trf.xlu0
        %v1235 = vpop.trf.xlu0
        %v1236 = vpop.trf.xlu0
        %v1237 = vpop.trf.xlu0
        %v1238 = vpop.trf.xlu0
        %v1239 = vpop.trf.xlu0
        %vm1240 = vcmask 261120
        %v1242 = vsel %vm1240, %v1232, 0
        %v1245 = vsel %vm1240, %v1233, 0
        %v1248 = vsel %vm1240, %v1234, 0
        %v1251 = vsel %vm1240, %v1235, 0
        %v1254 = vsel %vm1240, %v1236, 0
        %v1257 = vsel %vm1240, %v1237, 0
        %v1260 = vsel %vm1240, %v1238, 0
        %v1263 = vsel %vm1240, %v1239, 0
        %1265 = vmatprep.subr.bf16.mxu0 0
        %1266 = vmatpush1.bf16.msra.mxu0 %v1169
        %1267 = vmatprep.subr.bf16.mxu0 0
        %1268 = vmatpush1.bf16.msra.mxu0 %v1170
        %1269 = vmatprep.subr.bf16.mxu0 0
        %1270 = vmatpush1.bf16.msra.mxu0 0
        %1271 = vmatprep.subr.bf16.mxu0 0
        %1272 = vmatpush1.bf16.msra.mxu0 0
        %1273 = vmatprep.subr.bf16.mxu0 0
        %1274 = vmatpush1.bf16.msra.mxu0 0
        %1275 = vmatprep.subr.bf16.mxu0 0
        %1276 = vmatpush1.bf16.msra.mxu0 0
        %1277 = vmatprep.subr.bf16.mxu0 0
        %1278 = vmatpush1.bf16.msra.mxu0 0
        %1279 = vmatprep.subr.bf16.mxu0 0
        %1280 = vmatpush1.bf16.msra.mxu0 0
        %1281 = vmatprep.subr.bf16.mxu0 0
        %1282 = vmatpush1.bf16.msra.mxu0 0
        %1283 = vmatprep.subr.bf16.mxu0 0
        %1284 = vmatpush1.bf16.msra.mxu0 0
        %1285 = vmatprep.subr.bf16.mxu0 0
        %1286 = vmatpush1.bf16.msra.mxu0 0
        %1287 = vmatprep.subr.bf16.mxu0 0
        %1288 = vmatpush1.bf16.msra.mxu0 0
        %1289 = vmatprep.subr.bf16.mxu0 0
        %1290 = vmatpush1.bf16.msra.mxu0 0
        %1291 = vmatprep.subr.bf16.mxu0 0
        %1292 = vmatpush1.bf16.msra.mxu0 0
        %1293 = vmatprep.subr.bf16.mxu0 0
        %1294 = vmatpush1.bf16.msra.mxu0 0
        %1295 = vmatprep.subr.bf16.mxu0 0
        %1296 = vmatpush1.bf16.msra.mxu0 0
        %1297 = vmatprep.mubr.bf16.mxu0 0
        %1298 = vmatmul.mubr.bf16.gmra.mrb[0].mxu0 %v1242
        %v1299 = vpop.f32.mrb[0].mxu0
        %v1300 = vadd.f32 %v1208, %v1299
        %v1301 = vpop.f32.mrb[0].mxu0
        %v1302 = vpop.f32.mrb[0].mxu0
        %v1303 = vadd.f32 %v1209, %v1302
        %v1304 = vpop.f32.mrb[0].mxu0
        %1305 = vmatprep.mubr.bf16.mxu0 0
        %1306 = vmatmul.mubr.bf16.gmra.mrb[0].mxu0 %v1245
        %v1307 = vpop.f32.mrb[0].mxu0
        %v1308 = vadd.f32 %v1210, %v1307
        %v1309 = vpop.f32.mrb[0].mxu0
        %v1310 = vpop.f32.mrb[0].mxu0
        %v1311 = vadd.f32 %v1211, %v1310
        %v1312 = vpop.f32.mrb[0].mxu0
        %1313 = vmatprep.mubr.bf16.mxu0 0
        %1314 = vmatmul.mubr.bf16.gmra.mrb[0].mxu0 %v1248
        %v1315 = vpop.f32.mrb[0].mxu0
        %v1316 = vadd.f32 %v1212, %v1315
        %v1317 = vpop.f32.mrb[0].mxu0
        %v1318 = vpop.f32.mrb[0].mxu0
        %v1319 = vadd.f32 %v1213, %v1318
        %v1320 = vpop.f32.mrb[0].mxu0
        %1321 = vmatprep.mubr.bf16.mxu0 0
        %1322 = vmatmul.mubr.bf16.gmra.mrb[0].mxu0 %v1251
        %v1323 = vpop.f32.mrb[0].mxu0
        %v1324 = vadd.f32 %v1214, %v1323
        %v1325 = vpop.f32.mrb[0].mxu0
        %v1326 = vpop.f32.mrb[0].mxu0
        %v1327 = vadd.f32 %v1215, %v1326
        %v1328 = vpop.f32.mrb[0].mxu0
        %1329 = vmatprep.mubr.bf16.mxu0 0
        %1330 = vmatmul.mubr.bf16.gmra.mrb[0].mxu0 %v1254
        %v1331 = vpop.f32.mrb[0].mxu0
        %v1332 = vadd.f32 %v1216, %v1331
        %v1333 = vpop.f32.mrb[0].mxu0
        %v1334 = vpop.f32.mrb[0].mxu0
        %v1335 = vadd.f32 %v1217, %v1334
        %v1336 = vpop.f32.mrb[0].mxu0
        %1337 = vmatprep.mubr.bf16.mxu0 0
        %1338 = vmatmul.mubr.bf16.gmra.mrb[0].mxu0 %v1257
        %v1339 = vpop.f32.mrb[0].mxu0
        %v1340 = vadd.f32 %v1218, %v1339
        %v1341 = vpop.f32.mrb[0].mxu0
        %v1342 = vpop.f32.mrb[0].mxu0
        %v1343 = vadd.f32 %v1219, %v1342
        %v1344 = vpop.f32.mrb[0].mxu0
        %1345 = vmatprep.mubr.bf16.mxu0 0
        %1346 = vmatmul.mubr.bf16.gmra.mrb[0].mxu0 %v1260
        %v1347 = vpop.f32.mrb[0].mxu0
        %v1348 = vadd.f32 %v1220, %v1347
        %v1349 = vpop.f32.mrb[0].mxu0
        %v1350 = vpop.f32.mrb[0].mxu0
        %v1351 = vadd.f32 %v1221, %v1350
        %v1352 = vpop.f32.mrb[0].mxu0
        %1353 = vmatprep.mubr.bf16.mxu0 0
        %1354 = vmatmul.mubr.bf16.gmra.mrb[0].mxu0 %v1263
        %v1355 = vpop.f32.mrb[0].mxu0
        %v1356 = vadd.f32 %v1222, %v1355
        %v1357 = vpop.f32.mrb[0].mxu0
        %v1358 = vpop.f32.mrb[0].mxu0
        %v1359 = vadd.f32 %v1223, %v1358
        %v1360 = vpop.f32.mrb[0].mxu0
        %1361 = vdwg.mxu0
        %v1362 = vmax.f32 %v1300, %v1316
        %v1363 = vmax.f32 %v1303, %v1319
        %v1364 = vmax.f32 %v1308, %v1324
        %v1365 = vmax.f32 %v1311, %v1327
        %v1366 = vmax.f32 %v1362, %v1332
        %v1367 = vmax.f32 %v1363, %v1335
        %v1368 = vmax.f32 %v1364, %v1340
        %v1369 = vmax.f32 %v1365, %v1343
        %v1370 = vmax.f32 %v1366, %v1348
        %v1371 = vmax.f32 %v1367, %v1351
        %v1372 = vmax.f32 %v1368, %v1356
        %v1373 = vmax.f32 %v1369, %v1359
        %v1374 = vmax.f32 %v1370, %v1371
        %v1375 = vmax.f32 %v1372, %v1373
        %v1376 = vmax.f32 %v1374, %v1375
        %v1377 = vrot.slane %v1376, 4
        %v1378 = vmax.f32 %v1376, %v1377
        %v1379 = vrot.slane %v1378, 2
        %v1380 = vmax.f32 %v1378, %v1379
        %v1381 = vrot.slane %v1380, 1
        %v1382 = vmax.f32 %v1380, %v1381
        %v1383 = vmax.f32 %v1382, -1e+30
        %v1384 = vsub.f32 -1e+30, %v1383
        %v1385 = vmul.f32 %v1384, 1.442695
        %v1386 = vpow.pop %v1385
        %v1387 = vsub.f32 %v1300, %v1383
        %v1388 = vsub.f32 %v1303, %v1383
        %v1389 = vsub.f32 %v1308, %v1383
        %v1390 = vsub.f32 %v1311, %v1383
        %v1391 = vsub.f32 %v1316, %v1383
        %v1392 = vsub.f32 %v1319, %v1383
        %v1393 = vsub.f32 %v1324, %v1383
        %v1394 = vsub.f32 %v1327, %v1383
        %v1395 = vsub.f32 %v1332, %v1383
        %v1396 = vsub.f32 %v1335, %v1383
        %v1397 = vsub.f32 %v1340, %v1383
        %v1398 = vsub.f32 %v1343, %v1383
        %v1399 = vsub.f32 %v1348, %v1383
        %v1400 = vsub.f32 %v1351, %v1383
        %v1401 = vsub.f32 %v1356, %v1383
        %v1402 = vsub.f32 %v1359, %v1383
        %v1403 = vmul.f32 %v1387, 1.442695
        %v1404 = vpow.pop %v1403
        %v1405 = vmul.f32 %v1388, 1.442695
        %v1406 = vpow.pop %v1405
        %v1407 = vmul.f32 %v1389, 1.442695
        %v1408 = vpow.pop %v1407
        %v1409 = vmul.f32 %v1390, 1.442695
        %v1410 = vpow.pop %v1409
        %v1411 = vmul.f32 %v1391, 1.442695
        %v1412 = vpow.pop %v1411
        %v1413 = vmul.f32 %v1392, 1.442695
        %v1414 = vpow.pop %v1413
        %v1415 = vmul.f32 %v1393, 1.442695
        %v1416 = vpow.pop %v1415
        %v1417 = vmul.f32 %v1394, 1.442695
        %v1418 = vpow.pop %v1417
        %v1419 = vmul.f32 %v1395, 1.442695
        %v1420 = vpow.pop %v1419
        %v1421 = vmul.f32 %v1396, 1.442695
        %v1422 = vpow.pop %v1421
        %v1423 = vmul.f32 %v1397, 1.442695
        %v1424 = vpow.pop %v1423
        %v1425 = vmul.f32 %v1398, 1.442695
        %v1426 = vpow.pop %v1425
        %v1427 = vmul.f32 %v1399, 1.442695
        %v1428 = vpow.pop %v1427
        %v1429 = vmul.f32 %v1400, 1.442695
        %v1430 = vpow.pop %v1429
        %v1431 = vmul.f32 %v1401, 1.442695
        %v1432 = vpow.pop %v1431
        %v1433 = vmul.f32 %v1402, 1.442695
        %v1434 = vpow.pop %v1433
        %v1435 = vmul.f32 %v1386, 0.0
        %v1436 = vadd.f32 %v1404, %v1406
        %v1437 = vadd.f32 %v1436, %v1408
        %v1438 = vadd.f32 %v1437, %v1410
        %v1439 = vadd.f32 %v1438, %v1412
        %v1440 = vadd.f32 %v1439, %v1414
        %v1441 = vadd.f32 %v1440, %v1416
        %v1442 = vadd.f32 %v1441, %v1418
        %v1443 = vadd.f32 %v1442, %v1420
        %v1444 = vadd.f32 %v1443, %v1422
        %v1445 = vadd.f32 %v1444, %v1424
        %v1446 = vadd.f32 %v1445, %v1426
        %v1447 = vadd.f32 %v1446, %v1428
        %v1448 = vadd.f32 %v1447, %v1430
        %v1449 = vadd.f32 %v1448, %v1432
        %v1450 = vadd.f32 %v1449, %v1434
        %v1451 = vrot.slane %v1450, 4
        %v1452 = vadd.f32 %v1450, %v1451
        %v1453 = vrot.slane %v1452, 2
        %v1454 = vadd.f32 %v1452, %v1453
        %v1455 = vrot.slane %v1454, 1
        %v1456 = vadd.f32 %v1454, %v1455
        %v1457 = vadd.f32 %v1435, %v1456
        %v1458 = vpack.c.bf16 %v1406, %v1404
        %v1459 = vpack.c.bf16 %v1410, %v1408
        %v1460 = vpack.c.bf16 %v1414, %v1412
        %v1461 = vpack.c.bf16 %v1418, %v1416
        %v1462 = vpack.c.bf16 %v1422, %v1420
        %v1463 = vpack.c.bf16 %v1426, %v1424
        %v1464 = vpack.c.bf16 %v1430, %v1428
        %v1465 = vpack.c.bf16 %v1434, %v1432
        %1466 = vmatprep.subr.bf16.mxu0 0
        %1467 = vmatpush1.bf16.msra.mxu0 %v1458
        %1468 = vmatprep.subr.bf16.mxu0 0
        %1469 = vmatpush1.bf16.msra.mxu0 %v1459
        %1470 = vmatprep.subr.bf16.mxu0 0
        %1471 = vmatpush1.bf16.msra.mxu0 %v1460
        %1472 = vmatprep.subr.bf16.mxu0 0
        %1473 = vmatpush1.bf16.msra.mxu0 %v1461
        %1474 = vmatprep.subr.bf16.mxu0 0
        %1475 = vmatpush1.bf16.msra.mxu0 %v1462
        %1476 = vmatprep.subr.bf16.mxu0 0
        %1477 = vmatpush1.bf16.msra.mxu0 %v1463
        %1478 = vmatprep.subr.bf16.mxu0 0
        %1479 = vmatpush1.bf16.msra.mxu0 %v1464
        %1480 = vmatprep.subr.bf16.mxu0 0
        %1481 = vmatpush1.bf16.msra.mxu0 %v1465
        %1482 = vmatprep.subr.bf16.mxu0 0
        %1483 = vmatpush1.bf16.msra.mxu0 0
        %1484 = vmatprep.subr.bf16.mxu0 0
        %1485 = vmatpush1.bf16.msra.mxu0 0
        %1486 = vmatprep.subr.bf16.mxu0 0
        %1487 = vmatpush1.bf16.msra.mxu0 0
        %1488 = vmatprep.subr.bf16.mxu0 0
        %1489 = vmatpush1.bf16.msra.mxu0 0
        %1490 = vmatprep.subr.bf16.mxu0 0
        %1491 = vmatpush1.bf16.msra.mxu0 0
        %1492 = vmatprep.subr.bf16.mxu0 0
        %1493 = vmatpush1.bf16.msra.mxu0 0
        %1494 = vmatprep.subr.bf16.mxu0 0
        %1495 = vmatpush1.bf16.msra.mxu0 0
        %1496 = vmatprep.subr.bf16.mxu0 0
        %1497 = vmatpush1.bf16.msra.mxu0 0
        %1498 = vmatprep.mubr.bf16.mxu0 0
        %1499 = vmatmul.mubr.bf16.gmra.mrb[0].mxu0 %v1173
        %v1500 = vpop.f32.mrb[0].mxu0
        %v1501 = vadd.f32 0.0, %v1500
        %v1502 = vpop.f32.mrb[0].mxu0
        %v1503 = vpop.f32.mrb[0].mxu0
        %v1504 = vadd.f32 0.0, %v1503
        %v1505 = vpop.f32.mrb[0].mxu0
        %1506 = vmatprep.mubr.bf16.mxu0 0
        %1507 = vmatmul.mubr.bf16.gmra.mrb[0].mxu0 %v1174
        %v1508 = vpop.f32.mrb[0].mxu0
        %v1509 = vadd.f32 0.0, %v1508
        %v1510 = vpop.f32.mrb[0].mxu0
        %v1511 = vpop.f32.mrb[0].mxu0
        %v1512 = vadd.f32 0.0, %v1511
        %v1513 = vpop.f32.mrb[0].mxu0
        %1514 = vdwg.mxu0
        %v1515 = vadd.f32 %v1435, %v1501
        %v1516 = vadd.f32 %v1435, %v1504
        %v1517 = vadd.f32 %v1435, %v1509
        %v1518 = vadd.f32 %v1435, %v1512
        %v1519 = vrcp.pop %v1457
        %v1520 = vmul.f32 %v1515, %v1519
        %v1521 = vmul.f32 %v1516, %v1519
        %v1522 = vmul.f32 %v1517, %v1519
        %v1523 = vmul.f32 %v1518, %v1519
        %v1524 = vpack.c.bf16 %v1521, %v1520
        %v1525 = vpack.c.bf16 %v1523, %v1522
        %1526 = vst [vmem:[#allocation3] sm:$0xff] %v1524
        %1527 = vst [vmem:[#allocation3 + $0x8] sm:$0xff] %v1525
        %v1528 = vld [vmem:[#allocation2 + $0x30] sm:$0xff]
        %v1529 = vld [vmem:[#allocation2 + $0x38] sm:$0xff]
        %v1530 = vld [vmem:[#allocation2 + $0x40] sm:$0xff]
        %v1531 = vld [vmem:[#allocation2 + $0x48] sm:$0xff]
        %v1532 = vld [vmem:[#allocation2 + $0x50] sm:$0xff]
        %v1533 = vld [vmem:[#allocation2 + $0x58] sm:$0xff]
        %1534 = vxpose.xlu0.c.b16.start [1/8] %v1530, 128
        %1535 = vxpose.xlu0.c.b16.cont [2/8] %v1531, 128
        %1536 = vxpose.xlu0.c.b16.cont [3/8] 0, 128
        %1537 = vxpose.xlu0.c.b16.cont [4/8] 0, 128
        %1538 = vxpose.xlu0.c.b16.cont [5/8] 0, 128
        %1539 = vxpose.xlu0.c.b16.cont [6/8] 0, 128
        %1540 = vxpose.xlu0.c.b16.cont [7/8] 0, 128
        %1541 = vxpose.xlu0.c.b16.end [8/8] 0, 128
        %v1542 = vpop.trf.xlu0
        %v1543 = vpop.trf.xlu0
        %v1544 = vpop.trf.xlu0
        %v1545 = vpop.trf.xlu0
        %v1546 = vpop.trf.xlu0
        %v1547 = vpop.trf.xlu0
        %v1548 = vpop.trf.xlu0
        %v1549 = vpop.trf.xlu0
        %v1551 = vsel %vm1240, %v1542, 0
        %v1554 = vsel %vm1240, %v1543, 0
        %v1557 = vsel %vm1240, %v1544, 0
        %v1560 = vsel %vm1240, %v1545, 0
        %v1563 = vsel %vm1240, %v1546, 0
        %v1566 = vsel %vm1240, %v1547, 0
        %v1569 = vsel %vm1240, %v1548, 0
        %v1572 = vsel %vm1240, %v1549, 0
        %1574 = vmatprep.subr.bf16.mxu0 0
        %1575 = vmatpush1.bf16.msra.mxu0 %v1528
        %1576 = vmatprep.subr.bf16.mxu0 0
        %1577 = vmatpush1.bf16.msra.mxu0 %v1529
        %1578 = vmatprep.subr.bf16.mxu0 0
        %1579 = vmatpush1.bf16.msra.mxu0 0
        %1580 = vmatprep.subr.bf16.mxu0 0
        %1581 = vmatpush1.bf16.msra.mxu0 0
        %1582 = vmatprep.subr.bf16.mxu0 0
        %1583 = vmatpush1.bf16.msra.mxu0 0
        %1584 = vmatprep.subr.bf16.mxu0 0
        %1585 = vmatpush1.bf16.msra.mxu0 0
        %1586 = vmatprep.subr.bf16.mxu0 0
        %1587 = vmatpush1.bf16.msra.mxu0 0
        %1588 = vmatprep.subr.bf16.mxu0 0
        %1589 = vmatpush1.bf16.msra.mxu0 0
        %1590 = vmatprep.subr.bf16.mxu0 0
        %1591 = vmatpush1.bf16.msra.mxu0 0
        %1592 = vmatprep.subr.bf16.mxu0 0
        %1593 = vmatpush1.bf16.msra.mxu0 0
        %1594 = vmatprep.subr.bf16.mxu0 0
        %1595 = vmatpush1.bf16.msra.mxu0 0
        %1596 = vmatprep.subr.bf16.mxu0 0
        %1597 = vmatpush1.bf16.msra.mxu0 0
        %1598 = vmatprep.subr.bf16.mxu0 0
        %1599 = vmatpush1.bf16.msra.mxu0 0
        %1600 = vmatprep.subr.bf16.mxu0 0
        %1601 = vmatpush1.bf16.msra.mxu0 0
        %1602 = vmatprep.subr.bf16.mxu0 0
        %1603 = vmatpush1.bf16.msra.mxu0 0
        %1604 = vmatprep.subr.bf16.mxu0 0
        %1605 = vmatpush1.bf16.msra.mxu0 0
        %1606 = vmatprep.mubr.bf16.mxu0 0
        %1607 = vmatmul.mubr.bf16.gmra.mrb[0].mxu0 %v1551
        %v1608 = vpop.f32.mrb[0].mxu0
        %v1609 = vadd.f32 %v1208, %v1608
        %v1610 = vpop.f32.mrb[0].mxu0
        %v1611 = vpop.f32.mrb[0].mxu0
        %v1612 = vadd.f32 %v1209, %v1611
        %v1613 = vpop.f32.mrb[0].mxu0
        %1614 = vmatprep.mubr.bf16.mxu0 0
        %1615 = vmatmul.mubr.bf16.gmra.mrb[0].mxu0 %v1554
        %v1616 = vpop.f32.mrb[0].mxu0
        %v1617 = vadd.f32 %v1210, %v1616
        %v1618 = vpop.f32.mrb[0].mxu0
        %v1619 = vpop.f32.mrb[0].mxu0
        %v1620 = vadd.f32 %v1211, %v1619
        %v1621 = vpop.f32.mrb[0].mxu0
        %1622 = vmatprep.mubr.bf16.mxu0 0
        %1623 = vmatmul.mubr.bf16.gmra.mrb[0].mxu0 %v1557
        %v1624 = vpop.f32.mrb[0].mxu0
        %v1625 = vadd.f32 %v1212, %v1624
        %v1626 = vpop.f32.mrb[0].mxu0
        %v1627 = vpop.f32.mrb[0].mxu0
        %v1628 = vadd.f32 %v1213, %v1627
        %v1629 = vpop.f32.mrb[0].mxu0
        %1630 = vmatprep.mubr.bf16.mxu0 0
        %1631 = vmatmul.mubr.bf16.gmra.mrb[0].mxu0 %v1560
        %v1632 = vpop.f32.mrb[0].mxu0
        %v1633 = vadd.f32 %v1214, %v1632
        %v1634 = vpop.f32.mrb[0].mxu0
        %v1635 = vpop.f32.mrb[0].mxu0
        %v1636 = vadd.f32 %v1215, %v1635
        %v1637 = vpop.f32.mrb[0].mxu0
        %1638 = vmatprep.mubr.bf16.mxu0 0
        %1639 = vmatmul.mubr.bf16.gmra.mrb[0].mxu0 %v1563
        %v1640 = vpop.f32.mrb[0].mxu0
        %v1641 = vadd.f32 %v1216, %v1640
        %v1642 = vpop.f32.mrb[0].mxu0
        %v1643 = vpop.f32.mrb[0].mxu0
        %v1644 = vadd.f32 %v1217, %v1643
        %v1645 = vpop.f32.mrb[0].mxu0
        %1646 = vmatprep.mubr.bf16.mxu0 0
        %1647 = vmatmul.mubr.bf16.gmra.mrb[0].mxu0 %v1566
        %v1648 = vpop.f32.mrb[0].mxu0
        %v1649 = vadd.f32 %v1218, %v1648
        %v1650 = vpop.f32.mrb[0].mxu0
        %v1651 = vpop.f32.mrb[0].mxu0
        %v1652 = vadd.f32 %v1219, %v1651
        %v1653 = vpop.f32.mrb[0].mxu0
        %1654 = vmatprep.mubr.bf16.mxu0 0
        %1655 = vmatmul.mubr.bf16.gmra.mrb[0].mxu0 %v1569
        %v1656 = vpop.f32.mrb[0].mxu0
        %v1657 = vadd.f32 %v1220, %v1656
        %v1658 = vpop.f32.mrb[0].mxu0
        %v1659 = vpop.f32.mrb[0].mxu0
        %v1660 = vadd.f32 %v1221, %v1659
        %v1661 = vpop.f32.mrb[0].mxu0
        %1662 = vmatprep.mubr.bf16.mxu0 0
        %1663 = vmatmul.mubr.bf16.gmra.mrb[0].mxu0 %v1572
        %v1664 = vpop.f32.mrb[0].mxu0
        %v1665 = vadd.f32 %v1222, %v1664
        %v1666 = vpop.f32.mrb[0].mxu0
        %v1667 = vpop.f32.mrb[0].mxu0
        %v1668 = vadd.f32 %v1223, %v1667
        %v1669 = vpop.f32.mrb[0].mxu0
        %1670 = vdwg.mxu0
        %v1671 = vmax.f32 %v1609, %v1625
        %v1672 = vmax.f32 %v1612, %v1628
        %v1673 = vmax.f32 %v1617, %v1633
        %v1674 = vmax.f32 %v1620, %v1636
        %v1675 = vmax.f32 %v1671, %v1641
        %v1676 = vmax.f32 %v1672, %v1644
        %v1677 = vmax.f32 %v1673, %v1649
        %v1678 = vmax.f32 %v1674, %v1652
        %v1679 = vmax.f32 %v1675, %v1657
        %v1680 = vmax.f32 %v1676, %v1660
        %v1681 = vmax.f32 %v1677, %v1665
        %v1682 = vmax.f32 %v1678, %v1668
        %v1683 = vmax.f32 %v1679, %v1680
        %v1684 = vmax.f32 %v1681, %v1682
        %v1685 = vmax.f32 %v1683, %v1684
        %v1686 = vrot.slane %v1685, 4
        %v1687 = vmax.f32 %v1685, %v1686
        %v1688 = vrot.slane %v1687, 2
        %v1689 = vmax.f32 %v1687, %v1688
        %v1690 = vrot.slane %v1689, 1
        %v1691 = vmax.f32 %v1689, %v1690
        %v1692 = vmax.f32 %v1691, -1e+30
        %v1693 = vsub.f32 -1e+30, %v1692
        %v1694 = vmul.f32 %v1693, 1.442695
        %v1695 = vpow.pop %v1694
        %v1696 = vsub.f32 %v1609, %v1692
        %v1697 = vsub.f32 %v1612, %v1692
        %v1698 = vsub.f32 %v1617, %v1692
        %v1699 = vsub.f32 %v1620, %v1692
        %v1700 = vsub.f32 %v1625, %v1692
        %v1701 = vsub.f32 %v1628, %v1692
        %v1702 = vsub.f32 %v1633, %v1692
        %v1703 = vsub.f32 %v1636, %v1692
        %v1704 = vsub.f32 %v1641, %v1692
        %v1705 = vsub.f32 %v1644, %v1692
        %v1706 = vsub.f32 %v1649, %v1692
        %v1707 = vsub.f32 %v1652, %v1692
        %v1708 = vsub.f32 %v1657, %v1692
        %v1709 = vsub.f32 %v1660, %v1692
        %v1710 = vsub.f32 %v1665, %v1692
        %v1711 = vsub.f32 %v1668, %v1692
        %v1712 = vmul.f32 %v1696, 1.442695
        %v1713 = vpow.pop %v1712
        %v1714 = vmul.f32 %v1697, 1.442695
        %v1715 = vpow.pop %v1714
        %v1716 = vmul.f32 %v1698, 1.442695
        %v1717 = vpow.pop %v1716
        %v1718 = vmul.f32 %v1699, 1.442695
        %v1719 = vpow.pop %v1718
        %v1720 = vmul.f32 %v1700, 1.442695
        %v1721 = vpow.pop %v1720
        %v1722 = vmul.f32 %v1701, 1.442695
        %v1723 = vpow.pop %v1722
        %v1724 = vmul.f32 %v1702, 1.442695
        %v1725 = vpow.pop %v1724
        %v1726 = vmul.f32 %v1703, 1.442695
        %v1727 = vpow.pop %v1726
        %v1728 = vmul.f32 %v1704, 1.442695
        %v1729 = vpow.pop %v1728
        %v1730 = vmul.f32 %v1705, 1.442695
        %v1731 = vpow.pop %v1730
        %v1732 = vmul.f32 %v1706, 1.442695
        %v1733 = vpow.pop %v1732
        %v1734 = vmul.f32 %v1707, 1.442695
        %v1735 = vpow.pop %v1734
        %v1736 = vmul.f32 %v1708, 1.442695
        %v1737 = vpow.pop %v1736
        %v1738 = vmul.f32 %v1709, 1.442695
        %v1739 = vpow.pop %v1738
        %v1740 = vmul.f32 %v1710, 1.442695
        %v1741 = vpow.pop %v1740
        %v1742 = vmul.f32 %v1711, 1.442695
        %v1743 = vpow.pop %v1742
        %v1744 = vmul.f32 %v1695, 0.0
        %v1745 = vadd.f32 %v1713, %v1715
        %v1746 = vadd.f32 %v1745, %v1717
        %v1747 = vadd.f32 %v1746, %v1719
        %v1748 = vadd.f32 %v1747, %v1721
        %v1749 = vadd.f32 %v1748, %v1723
        %v1750 = vadd.f32 %v1749, %v1725
        %v1751 = vadd.f32 %v1750, %v1727
        %v1752 = vadd.f32 %v1751, %v1729
        %v1753 = vadd.f32 %v1752, %v1731
        %v1754 = vadd.f32 %v1753, %v1733
        %v1755 = vadd.f32 %v1754, %v1735
        %v1756 = vadd.f32 %v1755, %v1737
        %v1757 = vadd.f32 %v1756, %v1739
        %v1758 = vadd.f32 %v1757, %v1741
        %v1759 = vadd.f32 %v1758, %v1743
        %v1760 = vrot.slane %v1759, 4
        %v1761 = vadd.f32 %v1759, %v1760
        %v1762 = vrot.slane %v1761, 2
        %v1763 = vadd.f32 %v1761, %v1762
        %v1764 = vrot.slane %v1763, 1
        %v1765 = vadd.f32 %v1763, %v1764
        %v1766 = vadd.f32 %v1744, %v1765
        %v1767 = vpack.c.bf16 %v1715, %v1713
        %v1768 = vpack.c.bf16 %v1719, %v1717
        %v1769 = vpack.c.bf16 %v1723, %v1721
        %v1770 = vpack.c.bf16 %v1727, %v1725
        %v1771 = vpack.c.bf16 %v1731, %v1729
        %v1772 = vpack.c.bf16 %v1735, %v1733
        %v1773 = vpack.c.bf16 %v1739, %v1737
        %v1774 = vpack.c.bf16 %v1743, %v1741
        %1775 = vmatprep.subr.bf16.mxu0 0
        %1776 = vmatpush1.bf16.msra.mxu0 %v1767
        %1777 = vmatprep.subr.bf16.mxu0 0
        %1778 = vmatpush1.bf16.msra.mxu0 %v1768
        %1779 = vmatprep.subr.bf16.mxu0 0
        %1780 = vmatpush1.bf16.msra.mxu0 %v1769
        %1781 = vmatprep.subr.bf16.mxu0 0
        %1782 = vmatpush1.bf16.msra.mxu0 %v1770
        %1783 = vmatprep.subr.bf16.mxu0 0
        %1784 = vmatpush1.bf16.msra.mxu0 %v1771
        %1785 = vmatprep.subr.bf16.mxu0 0
        %1786 = vmatpush1.bf16.msra.mxu0 %v1772
        %1787 = vmatprep.subr.bf16.mxu0 0
        %1788 = vmatpush1.bf16.msra.mxu0 %v1773
        %1789 = vmatprep.subr.bf16.mxu0 0
        %1790 = vmatpush1.bf16.msra.mxu0 %v1774
        %1791 = vmatprep.subr.bf16.mxu0 0
        %1792 = vmatpush1.bf16.msra.mxu0 0
        %1793 = vmatprep.subr.bf16.mxu0 0
        %1794 = vmatpush1.bf16.msra.mxu0 0
        %1795 = vmatprep.subr.bf16.mxu0 0
        %1796 = vmatpush1.bf16.msra.mxu0 0
        %1797 = vmatprep.subr.bf16.mxu0 0
        %1798 = vmatpush1.bf16.msra.mxu0 0
        %1799 = vmatprep.subr.bf16.mxu0 0
        %1800 = vmatpush1.bf16.msra.mxu0 0
        %1801 = vmatprep.subr.bf16.mxu0 0
        %1802 = vmatpush1.bf16.msra.mxu0 0
        %1803 = vmatprep.subr.bf16.mxu0 0
        %1804 = vmatpush1.bf16.msra.mxu0 0
        %1805 = vmatprep.subr.bf16.mxu0 0
        %1806 = vmatpush1.bf16.msra.mxu0 0
        %1807 = vmatprep.mubr.bf16.mxu0 0
        %1808 = vmatmul.mubr.bf16.gmra.mrb[0].mxu0 %v1532
        %v1809 = vpop.f32.mrb[0].mxu0
        %v1810 = vadd.f32 0.0, %v1809
        %v1811 = vpop.f32.mrb[0].mxu0
        %v1812 = vpop.f32.mrb[0].mxu0
        %v1813 = vadd.f32 0.0, %v1812
        %v1814 = vpop.f32.mrb[0].mxu0
        %1815 = vmatprep.mubr.bf16.mxu0 0
        %1816 = vmatmul.mubr.bf16.gmra.mrb[0].mxu0 %v1533
        %v1817 = vpop.f32.mrb[0].mxu0
        %v1818 = vadd.f32 0.0, %v1817
        %v1819 = vpop.f32.mrb[0].mxu0
        %v1820 = vpop.f32.mrb[0].mxu0
        %v1821 = vadd.f32 0.0, %v1820
        %v1822 = vpop.f32.mrb[0].mxu0
        %1823 = vdwg.mxu0
        %v1824 = vadd.f32 %v1744, %v1810
        %v1825 = vadd.f32 %v1744, %v1813
        %v1826 = vadd.f32 %v1744, %v1818
        %v1827 = vadd.f32 %v1744, %v1821
        %v1828 = vrcp.pop %v1766
        %v1829 = vmul.f32 %v1824, %v1828
        %v1830 = vmul.f32 %v1825, %v1828
        %v1831 = vmul.f32 %v1826, %v1828
        %v1832 = vmul.f32 %v1827, %v1828
        %v1833 = vpack.c.bf16 %v1830, %v1829
        %v1834 = vpack.c.bf16 %v1832, %v1831
        %1835 = vst [vmem:[#allocation3 + $0x10] sm:$0xff] %v1833
        %1836 = vst [vmem:[#allocation3 + $0x18] sm:$0xff] %v1834
        %v1837 = vld [vmem:[%s6] sm:$0xf]
        %v1838 = vld [vmem:[%s6 + $0x4] sm:$0xf]
        %v1839 = vld [vmem:[%s6 + $0x8] sm:$0xf]
        %v1840 = vld [vmem:[%s6 + $0xc] sm:$0xf]
        %v1841 = vld [vmem:[%s6 + $0x10] sm:$0xf]
        %v1842 = vld [vmem:[%s6 + $0x14] sm:$0xf]
        %v1843 = vld [vmem:[%s6 + $0x18] sm:$0xf]
        %v1844 = vld [vmem:[%s6 + $0x1c] sm:$0xf]
        %v1845 = vld [vmem:[#allocation3] sm:$0xff]
        %v1846 = vld [vmem:[#allocation3 + $0x8] sm:$0xff]
        %v1847 = vld [vmem:[#allocation3 + $0x10] sm:$0xff]
        %v1848 = vld [vmem:[#allocation3 + $0x18] sm:$0xff]
        %v1857 = vunpack.c.l.b16 %v1837
        %v1858 = vunpack.c.l.b16 %v1838
        %v1859 = vunpack.c.l.b16 %v1839
        %v1860 = vunpack.c.l.b16 %v1840
        %v1861 = vunpack.c.l.b16 %v1841
        %v1862 = vunpack.c.l.b16 %v1842
        %v1863 = vunpack.c.l.b16 %v1843
        %v1864 = vunpack.c.l.b16 %v1844
        %v1865 = vpack.c.b16 %v1858, %v1857
        %v1866 = vpack.c.b16 %v1860, %v1859
        %v1867 = vpack.c.b16 %v1862, %v1861
        %v1868 = vpack.c.b16 %v1864, %v1863
        %v1870 = vsel %vm370, %v1865, 0
        %v1873 = vsel %vm370, %v1866, 0
        %v1876 = vsel %vm370, %v1867, 0
        %v1879 = vsel %vm370, %v1868, 0
        %1881 = vmatprep.subr.bf16.mxu0 0
        %1882 = vmatpush1.bf16.msra.mxu0 %v1845
        %1883 = vmatprep.subr.bf16.mxu0 0
        %1884 = vmatpush1.bf16.msra.mxu0 %v1846
        %1885 = vmatprep.subr.bf16.mxu0 0
        %1886 = vmatpush1.bf16.msra.mxu0 %v1847
        %1887 = vmatprep.subr.bf16.mxu0 0
        %1888 = vmatpush1.bf16.msra.mxu0 %v1848
        %1889 = vmatprep.subr.bf16.mxu0 0
        %1890 = vmatpush1.bf16.msra.mxu0 0
        %1891 = vmatprep.subr.bf16.mxu0 0
        %1892 = vmatpush1.bf16.msra.mxu0 0
        %1893 = vmatprep.subr.bf16.mxu0 0
        %1894 = vmatpush1.bf16.msra.mxu0 0
        %1895 = vmatprep.subr.bf16.mxu0 0
        %1896 = vmatpush1.bf16.msra.mxu0 0
        %1897 = vmatprep.subr.bf16.mxu0 0
        %1898 = vmatpush1.bf16.msra.mxu0 0
        %1899 = vmatprep.subr.bf16.mxu0 0
        %1900 = vmatpush1.bf16.msra.mxu0 0
        %1901 = vmatprep.subr.bf16.mxu0 0
        %1902 = vmatpush1.bf16.msra.mxu0 0
        %1903 = vmatprep.subr.bf16.mxu0 0
        %1904 = vmatpush1.bf16.msra.mxu0 0
        %1905 = vmatprep.subr.bf16.mxu0 0
        %1906 = vmatpush1.bf16.msra.mxu0 0
        %1907 = vmatprep.subr.bf16.mxu0 0
        %1908 = vmatpush1.bf16.msra.mxu0 0
        %1909 = vmatprep.subr.bf16.mxu0 0
        %1910 = vmatpush1.bf16.msra.mxu0 0
        %1911 = vmatprep.subr.bf16.mxu0 0
        %1912 = vmatpush1.bf16.msra.mxu0 0
        %1913 = vmatprep.mubr.bf16.mxu0 0
        %1914 = vmatmul.mubr.bf16.gmra.mrb[0].mxu0 %v1870
        %v1915 = vpop.f32.mrb[0].mxu0
        %v1916 = vadd.f32 0.0, %v1915
        %v1917 = vpop.f32.mrb[0].mxu0
        %v1918 = vpop.f32.mrb[0].mxu0
        %v1919 = vadd.f32 0.0, %v1918
        %v1920 = vpop.f32.mrb[0].mxu0
        %1921 = vmatprep.mubr.bf16.mxu0 0
        %1922 = vmatmul.mubr.bf16.gmra.mrb[0].mxu0 %v1873
        %v1923 = vpop.f32.mrb[0].mxu0
        %v1924 = vadd.f32 0.0, %v1923
        %v1925 = vpop.f32.mrb[0].mxu0
        %v1926 = vpop.f32.mrb[0].mxu0
        %v1927 = vadd.f32 0.0, %v1926
        %v1928 = vpop.f32.mrb[0].mxu0
        %1929 = vmatprep.mubr.bf16.mxu0 0
        %1930 = vmatmul.mubr.bf16.gmra.mrb[0].mxu0 %v1876
        %v1931 = vpop.f32.mrb[0].mxu0
        %v1932 = vadd.f32 0.0, %v1931
        %v1933 = vpop.f32.mrb[0].mxu0
        %v1934 = vpop.f32.mrb[0].mxu0
        %v1935 = vadd.f32 0.0, %v1934
        %v1936 = vpop.f32.mrb[0].mxu0
        %1937 = vmatprep.mubr.bf16.mxu0 0
        %1938 = vmatmul.mubr.bf16.gmra.mrb[0].mxu0 %v1879
        %v1939 = vpop.f32.mrb[0].mxu0
        %v1940 = vadd.f32 0.0, %v1939
        %v1941 = vpop.f32.mrb[0].mxu0
        %v1942 = vpop.f32.mrb[0].mxu0
        %v1943 = vadd.f32 0.0, %v1942
        %v1944 = vpop.f32.mrb[0].mxu0
        %1945 = vdwg.mxu0
        %v1946 = vld [vmem:[%s303] sm:$0xff]
        %v1947 = vld [vmem:[%s303 + $0x8] sm:$0xff]
        %v1948 = vld [vmem:[%s303 + $0x10] sm:$0xff]
        %v1949 = vld [vmem:[%s303 + $0x18] sm:$0xff]
        %v1950 = vld [vmem:[%s303 + $0x20] sm:$0xff]
        %v1951 = vld [vmem:[%s303 + $0x28] sm:$0xff]
        %v1952 = vld [vmem:[%s303 + $0x30] sm:$0xff]
        %v1953 = vld [vmem:[%s303 + $0x38] sm:$0xff]
        %v1954 = vadd.f32 %v1946, %v1916
        %v1955 = vadd.f32 %v1947, %v1919
        %v1956 = vadd.f32 %v1948, %v1924
        %v1957 = vadd.f32 %v1949, %v1927
        %v1958 = vadd.f32 %v1950, %v1932
        %v1959 = vadd.f32 %v1951, %v1935
        %v1960 = vadd.f32 %v1952, %v1940
        %v1961 = vadd.f32 %v1953, %v1943
        %v1962 = vld [vmem:[%s7] sm:$0xff]
        %v1963 = vld [vmem:[%s7 + $0x8] sm:$0xff]
        %v1964 = vld [vmem:[%s7 + $0x10] sm:$0xff]
        %v1965 = vld [vmem:[%s7 + $0x18] sm:$0xff]
        %v1966 = vld [vmem:[%s7 + $0x20] sm:$0xff]
        %v1967 = vld [vmem:[%s7 + $0x28] sm:$0xff]
        %v1968 = vld [vmem:[%s7 + $0x30] sm:$0xff]
        %v1969 = vld [vmem:[%s7 + $0x38] sm:$0xff]
        %1971 = vset.pattern.permute.xlu0 0
        %1972 = vperm.xlu0 %1971, %v1962
        %v1973 = vpop.permute.xlu0 %1972
        %1976 = vset.pattern.permute.xlu0 0
        %1977 = vperm.xlu0 %1976, %v1963
        %v1978 = vpop.permute.xlu0 %1977
        %1981 = vset.pattern.permute.xlu0 0
        %1982 = vperm.xlu0 %1981, %v1964
        %v1983 = vpop.permute.xlu0 %1982
        %1986 = vset.pattern.permute.xlu0 0
        %1987 = vperm.xlu0 %1986, %v1965
        %v1988 = vpop.permute.xlu0 %1987
        %1991 = vset.pattern.permute.xlu0 0
        %1992 = vperm.xlu0 %1991, %v1966
        %v1993 = vpop.permute.xlu0 %1992
        %1996 = vset.pattern.permute.xlu0 0
        %1997 = vperm.xlu0 %1996, %v1967
        %v1998 = vpop.permute.xlu0 %1997
        %2001 = vset.pattern.permute.xlu0 0
        %2002 = vperm.xlu0 %2001, %v1968
        %v2003 = vpop.permute.xlu0 %2002
        %2006 = vset.pattern.permute.xlu0 0
        %2007 = vperm.xlu0 %2006, %v1969
        %v2008 = vpop.permute.xlu0 %2007
        %v2010 = vadd.f32 %v1954, %v1973
        %v2011 = vadd.f32 %v1955, %v1978
        %v2012 = vadd.f32 %v1956, %v1983
        %v2013 = vadd.f32 %v1957, %v1988
        %v2014 = vadd.f32 %v1958, %v1993
        %v2015 = vadd.f32 %v1959, %v1998
        %v2016 = vadd.f32 %v1960, %v2003
        %v2017 = vadd.f32 %v1961, %v2008
        %2018 = vst [vmem:[%s298] sm:$0xff] %v2010
        %2019 = vst [vmem:[%s298 + $0x8] sm:$0xff] %v2011
        %2020 = vst [vmem:[%s298 + $0x10] sm:$0xff] %v2012
        %2021 = vst [vmem:[%s298 + $0x18] sm:$0xff] %v2013
        %2022 = vst [vmem:[%s298 + $0x20] sm:$0xff] %v2014
        %2023 = vst [vmem:[%s298 + $0x28] sm:$0xff] %v2015
        %2024 = vst [vmem:[%s298 + $0x30] sm:$0xff] %v2016
        %2025 = vst [vmem:[%s298 + $0x38] sm:$0xff] %v2017
        %s2026 = sand.u32 %s203, 1
        %s2027 = scalar_lea.sflag [#allocation5], %s2026
        %s2028 = sand.u32 %s203, 1
        %s2029 = smul.addr %s2028, 64
        %s2030 = scalar_lea.vmem [#allocation4], %s2029
        // Predicated region
        $region53: #{tpu_custom_call.1} parent=51 // pred_check
          %p2031 = pneg %p213
        $region54: #{tpu_custom_call.1} parent=51 // pred_check_branch
          %2033 = sbr.rel (%p2031) target = $region56
        $region55: #{tpu_custom_call.1} parent=51 // pred_region
          %s2035 = ssub.s32 1024, 1024
          %2036 = vsyncadd %s2027, %s2035
          %s2037 = smul.addr %s22, 8
          %s2038 = smul.addr %s2037, 128
          %s2039 = scalar_lea.hbm %s8, %s2038
          %s2040 = sshll.u32 %s2030, 4
          %s2041 = int_to_ptr.vmem [resolvable:$true] %s2040
          %2046 = dma.vmem_to_hbm [thread:$0]  %s2041, 1024, %s2039, %s2027, 128, 128, 8
        $region56: #{tpu_custom_call.1} parent=51 // pred_fallthru
          _
      $region52: #{tpu_custom_call.1} parent=5 // pred_fallthru
        _
      %p2047 = scmp.le.s32.totalorder 2, %s17
      // Predicated region
      $region57: #{tpu_custom_call.1} parent=5 // pred_check
        %p2048 = pneg %p2047
      $region58: #{tpu_custom_call.1} parent=5 // pred_check_branch
        %2050 = sbr.rel (%p2048) target = $region60
      $region59: #{tpu_custom_call.1} parent=5 // pred_region
        %s2051 = ssub.s32 %s17, 2
        // Predicated region
        $region61: #{tpu_custom_call.1} parent=59 // pred_check
          %p2052 = pneg %p219
        $region62: #{tpu_custom_call.1} parent=59 // pred_check_branch
          %2054 = sbr.rel (%p2052) target = $region64
        $region63: #{tpu_custom_call.1} parent=59 // pred_region
          %s2055 = sand.u32 %s204, 1
          %s2056 = scalar_lea.sflag [#allocation5], %s2055
          %s2057 = sand.u32 %s204, 1
          %s2058 = smul.addr %s2057, 64
          %s2059 = scalar_lea.vmem [#allocation4], %s2058
          %2060 = dma.done %s2056, 1024
        $region64: #{tpu_custom_call.1} parent=59 // pred_fallthru
          _
      $region60: #{tpu_custom_call.1} parent=5 // pred_fallthru
        _
    $region6: #{tpu_custom_call.1} parent=1 // loop_footer
      %s21 = sadd.s32 1, %s17
    $region7: #{tpu_custom_call.1} parent=1 // loop_footer_branch
      %16 = sbr.rel target = $region3
    $region8: #{tpu_custom_call.1} parent=1 // loop_exit
      _
    %2061 = vsyncpa [#allocation5], 1
    %s2062 = scalar_lea.sflag [#allocation5], 1
    %2063 = vsyncpa %s2062, 1

</llo_original>
